<compile_context>
chip_gen: v7x
topology: tpu7x:2x2x1
jax: 0.10.0
libtpu: 0.0.40
codegen_flags: <defaults>
</compile_context>

<pallas_src>
import jax
import jax.numpy as jnp
import numpy as np
from jax.experimental import pallas as pl
from jax.experimental.pallas import tpu as pltpu

# ---------------------------------------------------------------------------
# Problem sizes (small, consistent with the module).
# ---------------------------------------------------------------------------
B = 2            # batch
C_IN = 4         # input_dim
H = W = 64       # spatial (forced by the 16*32*32 linear fan-in)
C_OUT = 16       # conv output channels
OH = OW = 32     # conv output spatial (stride 2, pad 1)
S = OH * OW      # 1024 spatial positions after the conv
K = C_IN * 9     # 36 patch length (c, kh, kw)
A = 6            # action_space
D = C_OUT * S    # 16384 flattened feature dim
NOUT = A + 1     # policy logits + value, fused into one head


# ---------------------------------------------------------------------------
# Fused Pallas kernel: whole-batch conv-as-matmul + ReLU + policy/value heads.
# ---------------------------------------------------------------------------
def fused_ppo_kernel(p_ref, wc_ref, bc_ref, w3_ref, bh_ref, out_ref):
    # p_ref : (K, B*S)        bf16 im2col patches, column index = b*S + oh*OW + ow
    # wc_ref: (C_OUT, K)      bf16 conv weight (OIHW flatten)
    # bc_ref: (C_OUT, 1)      f32  conv bias
    # w3_ref: (NOUT, C_OUT,S) bf16 fused head weight, lane-dense layout
    # bh_ref: (1, NOUT)       f32  fused head bias
    # out_ref: (B, NOUT)      f32

    # Conv for the whole batch as one MXU matmul: (16,36)@(36,2048) -> (16,2048).
    h = jnp.dot(wc_ref[...], p_ref[...], preferred_element_type=jnp.float32)
    h = jnp.maximum(h + bc_ref[...], 0.0)             # f32 bias-add + ReLU (VPU)

    # Heads: out[b, a] = bh[a] + sum_{c,s} h[c, b*S+s] * w3[a, c, s]
    # VPU broadcast-multiply + reductions against the lane-dense (7,16,1024)
    # weight -- no tiny M=1 MXU dots, no in-kernel relayout of h.
    w3 = w3_ref[...].astype(jnp.float32)               # hoisted convert, (7,16,1024)
    partials = []
    for b in range(B):                                 # B=2, fully unrolled
        h_b = h[:, b * S:(b + 1) * S]                  # (16,1024), lane-aligned slice
        partials.append(jnp.sum(h_b * w3, axis=1))     # (7,1024)  sublane reduce
    p = jnp.stack(partials, axis=0)                    # (B,7,1024)
    out_ref[...] = jnp.sum(p, axis=-1) + bh_ref[...]   # (B,7) lane reduce + bias


# ---------------------------------------------------------------------------
# Glue: im2col (data rearrangement only; the hot path is in the kernel)
# ---------------------------------------------------------------------------
def im2col_s2_p1_k3(obs):
    """obs [B, C, 64, 64] NCHW -> patches (C*9, B*32*32), bf16.

    Row order (c, kh, kw) matches the OIHW conv-weight flatten; column order
    is (b, oh, ow), matching the whole-batch matmul and the CHW Flatten.
    """
    b, c, hh, ww = obs.shape
    oh, ow = hh // 2, ww // 2
    xpad = jnp.pad(obs, ((0, 0), (0, 0), (1, 1), (1, 1)))
    cols = []
    for kh in range(3):
        for kw in range(3):
            cols.append(xpad[:, :, kh:kh + hh:2, kw:kw + ww:2])   # (B, C, 32, 32)
    pat = jnp.stack(cols, axis=2).reshape(b, c * 9, oh * ow)       # (B, K, S)
    pat = jnp.transpose(pat, (1, 0, 2)).reshape(c * 9, b * oh * ow)
    return pat.astype(jnp.bfloat16)                                # (K, B*S)


# ---------------------------------------------------------------------------
# One-time parameter re-layout (hoisted out of the forward pass)
# ---------------------------------------------------------------------------
def prepare_kernel_params(params):
    wc, bc, wp, bp, wv, bv = params
    wc2d = wc.reshape(C_OUT, K).astype(jnp.bfloat16)          # (16, 36)
    bc_col = bc.reshape(C_OUT, 1).astype(jnp.float32)         # (16, 1)
    wh = jnp.concatenate([wp, wv], axis=1)                    # (D, NOUT), CHW order
    # lane-dense fused head weight: (NOUT, C_OUT, S)
    w3 = jnp.transpose(wh.reshape(C_OUT, S, NOUT), (2, 0, 1)).astype(jnp.bfloat16)
    bh = jnp.concatenate([bp, bv]).reshape(1, NOUT).astype(jnp.float32)
    return wc2d, bc_col, w3, bh


# ---------------------------------------------------------------------------
# Forward pass (single pallas_call, single grid step)
# ---------------------------------------------------------------------------
def ppo_forward_pallas(obs, kparams):
    wc2d, bc_col, w3, bh = kparams
    patches = im2col_s2_p1_k3(obs)                 # (36, B*1024) bf16

    flops = 2 * B * (C_OUT * K * S + D * NOUT)
    bytes_accessed = (patches.size * 2 + wc2d.size * 2 + bc_col.size * 4
                      + w3.size * 2 + bh.size * 4 + B * NOUT * 4)

    out = pl.pallas_call(
        fused_ppo_kernel,
        out_shape=jax.ShapeDtypeStruct((B, NOUT), jnp.float32),
        grid=(1,),
        in_specs=[
            pl.BlockSpec((K, B * S), lambda i: (0, 0)),
            pl.BlockSpec((C_OUT, K), lambda i: (0, 0)),
            pl.BlockSpec((C_OUT, 1), lambda i: (0, 0)),
            pl.BlockSpec((NOUT, C_OUT, S), lambda i: (0, 0, 0)),
            pl.BlockSpec((1, NOUT), lambda i: (0, 0)),
        ],
        out_specs=pl.BlockSpec((B, NOUT), lambda i: (0, 0)),
        compiler_params=pltpu.CompilerParams(
            dimension_semantics=("arbitrary",)),
        cost_estimate=pl.CostEstimate(flops=flops, transcendentals=0,
                                      bytes_accessed=bytes_accessed),
    )(patches, wc2d, bc_col, w3, bh)

    return out[:, :A], out[:, A:]                  # logits, value


# ---------------------------------------------------------------------------
# Pure-JAX reference with PyTorch semantics (NCHW conv, CHW flatten)
# ---------------------------------------------------------------------------
def ppo_forward_ref(obs, params):
    wc, bc, wp, bp, wv, bv = params
    y = jax.lax.conv_general_dilated(
        obs, wc, window_strides=(2, 2), padding=((1, 1), (1, 1)),
        dimension_numbers=("NCHW", "OIHW", "NCHW"))
    y = jnp.maximum(y + bc.reshape(1, C_OUT, 1, 1), 0.0)
    x = y.reshape(obs.shape[0], -1)                # PyTorch Flatten: CHW order
    return x @ wp + bp, x @ wv + bv


# ---------------------------------------------------------------------------
# Deterministic parameter init (PyTorch-style uniform fan-in scaling)
# ---------------------------------------------------------------------------
def init_params(key):
    ks = jax.random.split(key, 6)
    conv_bound = 1.0 / np.sqrt(C_IN * 9)
    head_bound = 1.0 / np.sqrt(D)
    wc = jax.random.uniform(ks[0], (C_OUT, C_IN, 3, 3), jnp.float32,
                            -conv_bound, conv_bound)
    bc = jax.random.uniform(ks[1], (C_OUT,), jnp.float32, -conv_bound, conv_bound)
    wp = jax.random.uniform(ks[2], (D, A), jnp.float32, -head_bound, head_bound)
    bp = jax.random.uniform(ks[3], (A,), jnp.float32, -head_bound, head_bound)
    wv = jax.random.uniform(ks[4], (D, 1), jnp.float32, -head_bound, head_bound)
    bv = jax.random.uniform(ks[5], (1,), jnp.float32, -head_bound, head_bound)
    return (wc, bc, wp, bp, wv, bv)


if __name__ == "__main__":
    key = jax.random.PRNGKey(0)
    pkey, okey = jax.random.split(key)
    params = init_params(pkey)
    kparams = prepare_kernel_params(params)   # hoisted: done once, not per call
    obs = jax.random.normal(okey, (B, C_IN, H, W), jnp.float32)

    fwd = jax.jit(ppo_forward_pallas)
    logits, value = fwd(obs, kparams)
    jax.block_until_ready((logits, value))

    ref_logits, ref_value = jax.jit(ppo_forward_ref)(obs, params)
    jax.block_until_ready((ref_logits, ref_value))

    assert logits.shape == (B, A) and value.shape == (B, 1)
    assert jnp.allclose(logits, ref_logits, atol=2e-2, rtol=2e-2), "logits mismatch"
    assert jnp.allclose(value, ref_value, atol=2e-2, rtol=2e-2), "value mismatch"

    print("KERNEL_OK")
</pallas_src>

<mosaic_0001>
module attributes {stable_mosaic.version = 11 : i64} {
  func.func @fused_ppo_kernel(%arg0: i32, %arg1: memref<36x2048xbf16, #tpu.memory_space<vmem>>, %arg2: memref<16x36xbf16, #tpu.memory_space<vmem>>, %arg3: memref<16x1xf32, #tpu.memory_space<vmem>>, %arg4: memref<7x16x1024xbf16, #tpu.memory_space<vmem>>, %arg5: memref<1x7xf32, #tpu.memory_space<vmem>>, %arg6: memref<2x7xf32, #tpu.memory_space<vmem>>) attributes {dimension_semantics = [#tpu.dimension_semantics<arbitrary>], iteration_bounds = array<i64: 1>, scalar_prefetch = 0 : i64, scratch_operands = 0 : i64, tpu.core_type = #tpu.core_type<tc>, window_params = [{pipeline_mode = #tpu.pipeline_mode<synchronous>, transform_indices = @transform_0, window_bounds = array<i64: 36, 2048>}, {pipeline_mode = #tpu.pipeline_mode<synchronous>, transform_indices = @transform_1, window_bounds = array<i64: 16, 36>}, {pipeline_mode = #tpu.pipeline_mode<synchronous>, transform_indices = @transform_2, window_bounds = array<i64: 16, 1>}, {pipeline_mode = #tpu.pipeline_mode<synchronous>, transform_indices = @transform_3, window_bounds = array<i64: 7, 16, 1024>}, {pipeline_mode = #tpu.pipeline_mode<synchronous>, transform_indices = @transform_4, window_bounds = array<i64: 1, 7>}, {pipeline_mode = #tpu.pipeline_mode<synchronous>, transform_indices = @transform_5, window_bounds = array<i64: 2, 7>}]} {
    %c0 = arith.constant 0 : index
    %c0_0 = arith.constant 0 : index
    %0 = vector.load %arg2[%c0, %c0_0] : memref<16x36xbf16, #tpu.memory_space<vmem>>, vector<16x36xbf16>
    %c0_1 = arith.constant 0 : index
    %c0_2 = arith.constant 0 : index
    %1 = vector.load %arg1[%c0_1, %c0_2] : memref<36x2048xbf16, #tpu.memory_space<vmem>>, vector<36x2048xbf16>
    %cst = arith.constant dense<0.000000e+00> : vector<16x2048xf32>
    %2 = tpu.matmul %0, %1, %cst {dimension_numbers = #tpu.dot_dimension_numbers<[1], [0], [0], [1], [0, 0, 1, 1], [], []>} : vector<16x36xbf16>, vector<36x2048xbf16>, vector<16x2048xf32> -> vector<16x2048xf32>
    %c0_3 = arith.constant 0 : index
    %c0_4 = arith.constant 0 : index
    %3 = vector.load %arg3[%c0_3, %c0_4] : memref<16x1xf32, #tpu.memory_space<vmem>>, vector<16x1xf32>
    %4 = vector.broadcast %3 : vector<16x1xf32> to vector<16x2048xf32>
    %5 = arith.addf %2, %4 : vector<16x2048xf32>
    %cst_5 = arith.constant 0.000000e+00 : f32
    %6 = vector.broadcast %cst_5 : f32 to vector<16x2048xf32>
    %7 = arith.maximumf %5, %6 : vector<16x2048xf32>
    %c0_6 = arith.constant 0 : index
    %c0_7 = arith.constant 0 : index
    %c0_8 = arith.constant 0 : index
    %8 = vector.load %arg4[%c0_6, %c0_7, %c0_8] : memref<7x16x1024xbf16, #tpu.memory_space<vmem>>, vector<7x16x1024xbf16>
    %9 = arith.extf %8 : vector<7x16x1024xbf16> to vector<7x16x1024xf32>
    %10 = vector.extract_strided_slice %7 {offsets = [0, 0], sizes = [16, 1024], strides = [1, 1]} : vector<16x2048xf32> to vector<16x1024xf32>
    %11 = vector.shape_cast %10 : vector<16x1024xf32> to vector<1x16x1024xf32>
    %12 = vector.broadcast %11 : vector<1x16x1024xf32> to vector<7x16x1024xf32>
    %13 = arith.mulf %12, %9 : vector<7x16x1024xf32>
    %cst_9 = arith.constant dense<0.000000e+00> : vector<7x1024xf32>
    %14 = vector.multi_reduction <add>, %13, %cst_9 [1] : vector<7x16x1024xf32> to vector<7x1024xf32>
    %15 = vector.extract_strided_slice %7 {offsets = [0, 1024], sizes = [16, 1024], strides = [1, 1]} : vector<16x2048xf32> to vector<16x1024xf32>
    %16 = vector.shape_cast %15 : vector<16x1024xf32> to vector<1x16x1024xf32>
    %17 = vector.broadcast %16 : vector<1x16x1024xf32> to vector<7x16x1024xf32>
    %18 = arith.mulf %17, %9 : vector<7x16x1024xf32>
    %cst_10 = arith.constant dense<0.000000e+00> : vector<7x1024xf32>
    %19 = vector.multi_reduction <add>, %18, %cst_10 [1] : vector<7x16x1024xf32> to vector<7x1024xf32>
    %20 = vector.shape_cast %14 : vector<7x1024xf32> to vector<1x7x1024xf32>
    %21 = vector.shape_cast %19 : vector<7x1024xf32> to vector<1x7x1024xf32>
    %22 = tpu.concatenate %20, %21 in 0 : vector<1x7x1024xf32>, vector<1x7x1024xf32> -> vector<2x7x1024xf32>
    %cst_11 = arith.constant dense<0.000000e+00> : vector<2x7xf32>
    %23 = vector.multi_reduction <add>, %22, %cst_11 [2] : vector<2x7x1024xf32> to vector<2x7xf32>
    %c0_12 = arith.constant 0 : index
    %c0_13 = arith.constant 0 : index
    %24 = vector.load %arg5[%c0_12, %c0_13] : memref<1x7xf32, #tpu.memory_space<vmem>>, vector<1x7xf32>
    %25 = vector.broadcast %24 : vector<1x7xf32> to vector<2x7xf32>
    %26 = arith.addf %23, %25 : vector<2x7xf32>
    %c0_14 = arith.constant 0 : index
    %c0_15 = arith.constant 0 : index
    %27 = vector.load %arg6[%c0_14, %c0_15] : memref<2x7xf32, #tpu.memory_space<vmem>>, vector<2x7xf32>
    tpu.vector_store %arg6[%c0_14, %c0_15], %26 {strides = array<i32>} : memref<2x7xf32, #tpu.memory_space<vmem>>, vector<2x7xf32>,
    return
  }
  func.func @transform_0(%arg0: i32) -> (i32, i32) {
    %c0_i32 = arith.constant 0 : i32
    %c0_i32_0 = arith.constant 0 : i32
    %c0_i32_1 = arith.constant 0 : i32
    return %c0_i32, %c0_i32_0 : i32, i32
  }
  func.func @transform_1(%arg0: i32) -> (i32, i32) {
    %c0_i32 = arith.constant 0 : i32
    %c0_i32_0 = arith.constant 0 : i32
    %c0_i32_1 = arith.constant 0 : i32
    return %c0_i32, %c0_i32_0 : i32, i32
  }
  func.func @transform_2(%arg0: i32) -> (i32, i32) {
    %c0_i32 = arith.constant 0 : i32
    %c0_i32_0 = arith.constant 0 : i32
    %c0_i32_1 = arith.constant 0 : i32
    return %c0_i32, %c0_i32_0 : i32, i32
  }
  func.func @transform_3(%arg0: i32) -> (i32, i32, i32) {
    %c0_i32 = arith.constant 0 : i32
    %c0_i32_0 = arith.constant 0 : i32
    %c0_i32_1 = arith.constant 0 : i32
    %c0_i32_2 = arith.constant 0 : i32
    return %c0_i32, %c0_i32_0, %c0_i32_1 : i32, i32, i32
  }
  func.func @transform_4(%arg0: i32) -> (i32, i32) {
    %c0_i32 = arith.constant 0 : i32
    %c0_i32_0 = arith.constant 0 : i32
    %c0_i32_1 = arith.constant 0 : i32
    return %c0_i32, %c0_i32_0 : i32, i32
  }
  func.func @transform_5(%arg0: i32) -> (i32, i32) {
    %c0_i32 = arith.constant 0 : i32
    %c0_i32_0 = arith.constant 0 : i32
    %c0_i32_1 = arith.constant 0 : i32
    return %c0_i32, %c0_i32_0 : i32, i32
  }
}

</mosaic_0001>

<llo_original>
// kernel: ppo_forward_pallas.1
$region0: #{ppo_forward_pallas.1}
  #allocation0 [shape = 'u32[]', space=smem, size = 0x4, offset = 0x4, fixed_abs, tag = 'smem constant byte address 0x4 - core index']
  #allocation1 [shape = 'u32[144,128]{1,0:T(1,128)}', space=vmem, size = 0x12000, scoped, tag = 'internal scratch']
  %s0 = inlined_call_operand.vmem [shape: bf16[36,2048], index: 0, kind: input, shape index: {}]
  %s1 = inlined_call_operand.vmem [shape: bf16[16,36], index: 1, kind: input, shape index: {}]
  %s2 = inlined_call_operand.vmem [shape: f32[16,1], index: 2, kind: input, shape index: {}]
  %s3 = inlined_call_operand.vmem [shape: bf16[7,16,1024], index: 3, kind: input, shape index: {}]
  %s4 = inlined_call_operand.vmem [shape: f32[1,7], index: 4, kind: input, shape index: {}]
  %s5 = inlined_call_operand.vmem [shape: f32[2,7], index: 5, kind: output, shape index: {}]
  %s6 = sld [smem:[#allocation0]]
  $region30: #{ppo_forward_pallas.1} parent=0
    _
  %s8 = ssub.s32 1, %s6
  %s9 = scalar_select 0, %s8, %s6
  // Predicated region
  $region2: #{ppo_forward_pallas.1} parent=0 // pred_check
    _
  $region3: #{ppo_forward_pallas.1} parent=0 // pred_check_branch
    %11 = sbr.rel (0) target = $region5
  $region4: #{ppo_forward_pallas.1} parent=0 // pred_region
    _
  $region5: #{ppo_forward_pallas.1} parent=0 // pred_fallthru
    _
  // Predicated region
  $region6: #{ppo_forward_pallas.1} parent=0 // pred_check
    _
  $region7: #{ppo_forward_pallas.1} parent=0 // pred_check_branch
    %13 = sbr.rel (0) target = $region9
  $region8: #{ppo_forward_pallas.1} parent=0 // pred_region
    _
  $region9: #{ppo_forward_pallas.1} parent=0 // pred_fallthru
    _
  // Predicated region
  $region10: #{ppo_forward_pallas.1} parent=0 // pred_check
    _
  $region11: #{ppo_forward_pallas.1} parent=0 // pred_check_branch
    %15 = sbr.rel (0) target = $region13
  $region12: #{ppo_forward_pallas.1} parent=0 // pred_region
    _
  $region13: #{ppo_forward_pallas.1} parent=0 // pred_fallthru
    _
  // Predicated region
  $region14: #{ppo_forward_pallas.1} parent=0 // pred_check
    _
  $region15: #{ppo_forward_pallas.1} parent=0 // pred_check_branch
    %17 = sbr.rel (0) target = $region17
  $region16: #{ppo_forward_pallas.1} parent=0 // pred_region
    _
  $region17: #{ppo_forward_pallas.1} parent=0 // pred_fallthru
    _
  // Predicated region
  $region18: #{ppo_forward_pallas.1} parent=0 // pred_check
    _
  $region19: #{ppo_forward_pallas.1} parent=0 // pred_check_branch
    %19 = sbr.rel (0) target = $region21
  $region20: #{ppo_forward_pallas.1} parent=0 // pred_region
    _
  $region21: #{ppo_forward_pallas.1} parent=0 // pred_fallthru
    _
  %v21 = vld [vmem:[%s1] sm:$0xf]
  %v22 = vld [vmem:[%s1 + $0x4] sm:$0xf]
  %v23 = vld [vmem:[%s0] sm:$0xff]
  %v24 = vld [vmem:[%s0 + $0x8] sm:$0xff]
  %v25 = vld [vmem:[%s0 + $0x10] sm:$0xff]
  %v26 = vld [vmem:[%s0 + $0x18] sm:$0xff]
  %v27 = vld [vmem:[%s0 + $0x20] sm:$0xff]
  %v28 = vld [vmem:[%s0 + $0x28] sm:$0xff]
  %v29 = vld [vmem:[%s0 + $0x30] sm:$0xff]
  %v30 = vld [vmem:[%s0 + $0x38] sm:$0xff]
  %v31 = vld [vmem:[%s0 + $0x40] sm:$0xff]
  %v32 = vld [vmem:[%s0 + $0x48] sm:$0xff]
  %v33 = vld [vmem:[%s0 + $0x50] sm:$0xff]
  %v34 = vld [vmem:[%s0 + $0x58] sm:$0xff]
  %v35 = vld [vmem:[%s0 + $0x60] sm:$0xff]
  %v36 = vld [vmem:[%s0 + $0x68] sm:$0xff]
  %v37 = vld [vmem:[%s0 + $0x70] sm:$0xff]
  %v38 = vld [vmem:[%s0 + $0x78] sm:$0xff]
  %v39 = vld [vmem:[%s0 + $0x80] sm:$0xff]
  %v40 = vld [vmem:[%s0 + $0x88] sm:$0xff]
  %v41 = vld [vmem:[%s0 + $0x90] sm:$0xff]
  %v42 = vld [vmem:[%s0 + $0x98] sm:$0xff]
  %v43 = vld [vmem:[%s0 + $0xa0] sm:$0xff]
  %v44 = vld [vmem:[%s0 + $0xa8] sm:$0xff]
  %v45 = vld [vmem:[%s0 + $0xb0] sm:$0xff]
  %v46 = vld [vmem:[%s0 + $0xb8] sm:$0xff]
  %v47 = vld [vmem:[%s0 + $0xc0] sm:$0xff]
  %v48 = vld [vmem:[%s0 + $0xc8] sm:$0xff]
  %v49 = vld [vmem:[%s0 + $0xd0] sm:$0xff]
  %v50 = vld [vmem:[%s0 + $0xd8] sm:$0xff]
  %v51 = vld [vmem:[%s0 + $0xe0] sm:$0xff]
  %v52 = vld [vmem:[%s0 + $0xe8] sm:$0xff]
  %v53 = vld [vmem:[%s0 + $0xf0] sm:$0xff]
  %v54 = vld [vmem:[%s0 + $0xf8] sm:$0xff]
  %v55 = vld [vmem:[%s0 + $0x100] sm:$0x33]
  %v56 = vld [vmem:[%s0 + $0x108] sm:$0x33]
  %v57 = vld [vmem:[%s0 + $0x110] sm:$0x33]
  %v58 = vld [vmem:[%s0 + $0x118] sm:$0x33]
  %v59 = vld [vmem:[%s0 + $0x120] sm:$0x33]
  %v60 = vld [vmem:[%s0 + $0x128] sm:$0x33]
  %v61 = vld [vmem:[%s0 + $0x130] sm:$0x33]
  %v62 = vld [vmem:[%s0 + $0x138] sm:$0x33]
  %v63 = vld [vmem:[%s2] sm:$0xff]
  %v64 = vld [vmem:[%s2 + $0x8] sm:$0xff]
  %66 = vset.pattern.permute.xlu0 0
  %67 = vperm.xlu0 %66, %v63
  %v68 = vpop.permute.xlu0 %67
  %71 = vset.pattern.permute.xlu0 0
  %72 = vperm.xlu0 %71, %v64
  %v73 = vpop.permute.xlu0 %72
  %v77 = vunpack.c.l.b16 %v21
  %v78 = vunpack.c.l.b16 %v22
  %v79 = vpack.c.b16 %v78, %v77
  %v120 = vunpack.c.l.b16 %v23
  %v121 = vunpack.c.h.b16 %v23
  %v122 = vunpack.c.l.b16 %v24
  %v123 = vunpack.c.h.b16 %v24
  %v124 = vunpack.c.l.b16 %v25
  %v125 = vunpack.c.h.b16 %v25
  %v126 = vunpack.c.l.b16 %v26
  %v127 = vunpack.c.h.b16 %v26
  %v128 = vunpack.c.l.b16 %v27
  %v129 = vunpack.c.h.b16 %v27
  %v130 = vunpack.c.l.b16 %v28
  %v131 = vunpack.c.h.b16 %v28
  %v132 = vunpack.c.l.b16 %v29
  %v133 = vunpack.c.h.b16 %v29
  %v134 = vunpack.c.l.b16 %v30
  %v135 = vunpack.c.h.b16 %v30
  %v136 = vunpack.c.l.b16 %v31
  %v137 = vunpack.c.h.b16 %v31
  %v138 = vunpack.c.l.b16 %v32
  %v139 = vunpack.c.h.b16 %v32
  %v140 = vunpack.c.l.b16 %v33
  %v141 = vunpack.c.h.b16 %v33
  %v142 = vunpack.c.l.b16 %v34
  %v143 = vunpack.c.h.b16 %v34
  %v144 = vunpack.c.l.b16 %v35
  %v145 = vunpack.c.h.b16 %v35
  %v146 = vunpack.c.l.b16 %v36
  %v147 = vunpack.c.h.b16 %v36
  %v148 = vunpack.c.l.b16 %v37
  %v149 = vunpack.c.h.b16 %v37
  %v150 = vunpack.c.l.b16 %v38
  %v151 = vunpack.c.h.b16 %v38
  %v152 = vunpack.c.l.b16 %v39
  %v153 = vunpack.c.h.b16 %v39
  %v154 = vunpack.c.l.b16 %v40
  %v155 = vunpack.c.h.b16 %v40
  %v156 = vunpack.c.l.b16 %v41
  %v157 = vunpack.c.h.b16 %v41
  %v158 = vunpack.c.l.b16 %v42
  %v159 = vunpack.c.h.b16 %v42
  %v160 = vunpack.c.l.b16 %v43
  %v161 = vunpack.c.h.b16 %v43
  %v162 = vunpack.c.l.b16 %v44
  %v163 = vunpack.c.h.b16 %v44
  %v164 = vunpack.c.l.b16 %v45
  %v165 = vunpack.c.h.b16 %v45
  %v166 = vunpack.c.l.b16 %v46
  %v167 = vunpack.c.h.b16 %v46
  %v168 = vunpack.c.l.b16 %v47
  %v169 = vunpack.c.h.b16 %v47
  %v170 = vunpack.c.l.b16 %v48
  %v171 = vunpack.c.h.b16 %v48
  %v172 = vunpack.c.l.b16 %v49
  %v173 = vunpack.c.h.b16 %v49
  %v174 = vunpack.c.l.b16 %v50
  %v175 = vunpack.c.h.b16 %v50
  %v176 = vunpack.c.l.b16 %v51
  %v177 = vunpack.c.h.b16 %v51
  %v178 = vunpack.c.l.b16 %v52
  %v179 = vunpack.c.h.b16 %v52
  %v180 = vunpack.c.l.b16 %v53
  %v181 = vunpack.c.h.b16 %v53
  %v182 = vunpack.c.l.b16 %v54
  %v183 = vunpack.c.h.b16 %v54
  %v184 = vunpack.c.l.b16 %v55
  %v185 = vunpack.c.h.b16 %v55
  %v186 = vunpack.c.l.b16 %v56
  %v187 = vunpack.c.h.b16 %v56
  %v188 = vunpack.c.l.b16 %v57
  %v189 = vunpack.c.h.b16 %v57
  %v190 = vunpack.c.l.b16 %v58
  %v191 = vunpack.c.h.b16 %v58
  %v192 = vunpack.c.l.b16 %v59
  %v193 = vunpack.c.h.b16 %v59
  %v194 = vunpack.c.l.b16 %v60
  %v195 = vunpack.c.h.b16 %v60
  %v196 = vunpack.c.l.b16 %v61
  %v197 = vunpack.c.h.b16 %v61
  %v198 = vunpack.c.l.b16 %v62
  %v199 = vunpack.c.h.b16 %v62
  %v200 = vpack.c.b16 %v136, %v120
  %v201 = vpack.c.b16 %v137, %v121
  %v202 = vpack.c.b16 %v138, %v122
  %v203 = vpack.c.b16 %v139, %v123
  %v204 = vpack.c.b16 %v140, %v124
  %v205 = vpack.c.b16 %v141, %v125
  %v206 = vpack.c.b16 %v142, %v126
  %v207 = vpack.c.b16 %v143, %v127
  %v208 = vpack.c.b16 %v144, %v128
  %v209 = vpack.c.b16 %v145, %v129
  %v210 = vpack.c.b16 %v146, %v130
  %v211 = vpack.c.b16 %v147, %v131
  %v212 = vpack.c.b16 %v148, %v132
  %v213 = vpack.c.b16 %v149, %v133
  %v214 = vpack.c.b16 %v150, %v134
  %v215 = vpack.c.b16 %v151, %v135
  %v216 = vpack.c.b16 %v168, %v152
  %v217 = vpack.c.b16 %v169, %v153
  %v218 = vpack.c.b16 %v170, %v154
  %v219 = vpack.c.b16 %v171, %v155
  %v220 = vpack.c.b16 %v172, %v156
  %v221 = vpack.c.b16 %v173, %v157
  %v222 = vpack.c.b16 %v174, %v158
  %v223 = vpack.c.b16 %v175, %v159
  %v224 = vpack.c.b16 %v176, %v160
  %v225 = vpack.c.b16 %v177, %v161
  %v226 = vpack.c.b16 %v178, %v162
  %v227 = vpack.c.b16 %v179, %v163
  %v228 = vpack.c.b16 %v180, %v164
  %v229 = vpack.c.b16 %v181, %v165
  %v230 = vpack.c.b16 %v182, %v166
  %v231 = vpack.c.b16 %v183, %v167
  %v232 = vpack.c.b16 %v184, %v184
  %v233 = vpack.c.b16 %v185, %v185
  %v234 = vpack.c.b16 %v186, %v186
  %v235 = vpack.c.b16 %v187, %v187
  %v236 = vpack.c.b16 %v188, %v188
  %v237 = vpack.c.b16 %v189, %v189
  %v238 = vpack.c.b16 %v190, %v190
  %v239 = vpack.c.b16 %v191, %v191
  %v240 = vpack.c.b16 %v192, %v192
  %v241 = vpack.c.b16 %v193, %v193
  %v242 = vpack.c.b16 %v194, %v194
  %v243 = vpack.c.b16 %v195, %v195
  %v244 = vpack.c.b16 %v196, %v196
  %v245 = vpack.c.b16 %v197, %v197
  %v246 = vpack.c.b16 %v198, %v198
  %v247 = vpack.c.b16 %v199, %v199
  %vm280 = vcmask 293888
  %v282 = vsel %vm280, %v79, 0
  %vm284 = vcmask 1041408
  %v286 = vsel %vm284, %v232, 0
  %v289 = vsel %vm284, %v233, 0
  %v292 = vsel %vm284, %v234, 0
  %v295 = vsel %vm284, %v235, 0
  %v298 = vsel %vm284, %v236, 0
  %v301 = vsel %vm284, %v237, 0
  %v304 = vsel %vm284, %v238, 0
  %v307 = vsel %vm284, %v239, 0
  %v310 = vsel %vm284, %v240, 0
  %v313 = vsel %vm284, %v241, 0
  %v316 = vsel %vm284, %v242, 0
  %v319 = vsel %vm284, %v243, 0
  %v322 = vsel %vm284, %v244, 0
  %v325 = vsel %vm284, %v245, 0
  %v328 = vsel %vm284, %v246, 0
  %v331 = vsel %vm284, %v247, 0
  %333 = vmatprep.subr.bf16.mxu0 %v201
  %334 = vmatpush1.bf16.msra.mxu0 %v200
  %335 = vmatprep.subr.bf16.mxu0 %v217
  %336 = vmatpush1.bf16.msra.mxu0 %v216
  %337 = vmatprep.subr.bf16.mxu0 %v289
  %338 = vmatpush1.bf16.msra.mxu0 %v286
  %339 = vmatprep.subr.bf16.mxu0 0
  %340 = vmatpush1.bf16.msra.mxu0 0
  %341 = vmatprep.subr.bf16.mxu0 0
  %342 = vmatpush1.bf16.msra.mxu0 0
  %343 = vmatprep.subr.bf16.mxu0 0
  %344 = vmatpush1.bf16.msra.mxu0 0
  %345 = vmatprep.subr.bf16.mxu0 0
  %346 = vmatpush1.bf16.msra.mxu0 0
  %347 = vmatprep.subr.bf16.mxu0 0
  %348 = vmatpush1.bf16.msra.mxu0 0
  %349 = vmatprep.subr.bf16.mxu0 0
  %350 = vmatpush1.bf16.msra.mxu0 0
  %351 = vmatprep.subr.bf16.mxu0 0
  %352 = vmatpush1.bf16.msra.mxu0 0
  %353 = vmatprep.subr.bf16.mxu0 0
  %354 = vmatpush1.bf16.msra.mxu0 0
  %355 = vmatprep.subr.bf16.mxu0 0
  %356 = vmatpush1.bf16.msra.mxu0 0
  %357 = vmatprep.subr.bf16.mxu0 0
  %358 = vmatpush1.bf16.msra.mxu0 0
  %359 = vmatprep.subr.bf16.mxu0 0
  %360 = vmatpush1.bf16.msra.mxu0 0
  %361 = vmatprep.subr.bf16.mxu0 0
  %362 = vmatpush1.bf16.msra.mxu0 0
  %363 = vmatprep.subr.bf16.mxu0 0
  %364 = vmatpush1.bf16.msra.mxu0 0
  %365 = vmatprep.mubr.bf16.mxu0 0
  %366 = vmatmul.mubr.bf16.gmra.mrb[0].mxu0 %v282
  %v367 = vpop.f32.mrb[0].mxu0
  %v368 = vadd.f32 %v68, %v367
  %v369 = vpop.f32.mrb[0].mxu0
  %v370 = vadd.f32 %v68, %v369
  %v371 = vpop.f32.mrb[0].mxu0
  %v372 = vadd.f32 %v73, %v371
  %v373 = vpop.f32.mrb[0].mxu0
  %v374 = vadd.f32 %v73, %v373
  %375 = vdwg.mxu0
  %376 = vmatprep.subr.bf16.mxu0 %v203
  %377 = vmatpush1.bf16.msra.mxu0 %v202
  %378 = vmatprep.subr.bf16.mxu0 %v219
  %379 = vmatpush1.bf16.msra.mxu0 %v218
  %380 = vmatprep.subr.bf16.mxu0 %v295
  %381 = vmatpush1.bf16.msra.mxu0 %v292
  %382 = vmatprep.subr.bf16.mxu0 0
  %383 = vmatpush1.bf16.msra.mxu0 0
  %384 = vmatprep.subr.bf16.mxu0 0
  %385 = vmatpush1.bf16.msra.mxu0 0
  %386 = vmatprep.subr.bf16.mxu0 0
  %387 = vmatpush1.bf16.msra.mxu0 0
  %388 = vmatprep.subr.bf16.mxu0 0
  %389 = vmatpush1.bf16.msra.mxu0 0
  %390 = vmatprep.subr.bf16.mxu0 0
  %391 = vmatpush1.bf16.msra.mxu0 0
  %392 = vmatprep.subr.bf16.mxu0 0
  %393 = vmatpush1.bf16.msra.mxu0 0
  %394 = vmatprep.subr.bf16.mxu0 0
  %395 = vmatpush1.bf16.msra.mxu0 0
  %396 = vmatprep.subr.bf16.mxu0 0
  %397 = vmatpush1.bf16.msra.mxu0 0
  %398 = vmatprep.subr.bf16.mxu0 0
  %399 = vmatpush1.bf16.msra.mxu0 0
  %400 = vmatprep.subr.bf16.mxu0 0
  %401 = vmatpush1.bf16.msra.mxu0 0
  %402 = vmatprep.subr.bf16.mxu0 0
  %403 = vmatpush1.bf16.msra.mxu0 0
  %404 = vmatprep.subr.bf16.mxu0 0
  %405 = vmatpush1.bf16.msra.mxu0 0
  %406 = vmatprep.subr.bf16.mxu0 0
  %407 = vmatpush1.bf16.msra.mxu0 0
  %408 = vmatprep.mubr.bf16.mxu0 0
  %409 = vmatmul.mubr.bf16.gmra.mrb[0].mxu0 %v282
  %v410 = vpop.f32.mrb[0].mxu0
  %v411 = vadd.f32 %v68, %v410
  %v412 = vpop.f32.mrb[0].mxu0
  %v413 = vadd.f32 %v68, %v412
  %v414 = vpop.f32.mrb[0].mxu0
  %v415 = vadd.f32 %v73, %v414
  %v416 = vpop.f32.mrb[0].mxu0
  %v417 = vadd.f32 %v73, %v416
  %418 = vdwg.mxu0
  %419 = vmatprep.subr.bf16.mxu0 %v205
  %420 = vmatpush1.bf16.msra.mxu0 %v204
  %421 = vmatprep.subr.bf16.mxu0 %v221
  %422 = vmatpush1.bf16.msra.mxu0 %v220
  %423 = vmatprep.subr.bf16.mxu0 %v301
  %424 = vmatpush1.bf16.msra.mxu0 %v298
  %425 = vmatprep.subr.bf16.mxu0 0
  %426 = vmatpush1.bf16.msra.mxu0 0
  %427 = vmatprep.subr.bf16.mxu0 0
  %428 = vmatpush1.bf16.msra.mxu0 0
  %429 = vmatprep.subr.bf16.mxu0 0
  %430 = vmatpush1.bf16.msra.mxu0 0
  %431 = vmatprep.subr.bf16.mxu0 0
  %432 = vmatpush1.bf16.msra.mxu0 0
  %433 = vmatprep.subr.bf16.mxu0 0
  %434 = vmatpush1.bf16.msra.mxu0 0
  %435 = vmatprep.subr.bf16.mxu0 0
  %436 = vmatpush1.bf16.msra.mxu0 0
  %437 = vmatprep.subr.bf16.mxu0 0
  %438 = vmatpush1.bf16.msra.mxu0 0
  %439 = vmatprep.subr.bf16.mxu0 0
  %440 = vmatpush1.bf16.msra.mxu0 0
  %441 = vmatprep.subr.bf16.mxu0 0
  %442 = vmatpush1.bf16.msra.mxu0 0
  %443 = vmatprep.subr.bf16.mxu0 0
  %444 = vmatpush1.bf16.msra.mxu0 0
  %445 = vmatprep.subr.bf16.mxu0 0
  %446 = vmatpush1.bf16.msra.mxu0 0
  %447 = vmatprep.subr.bf16.mxu0 0
  %448 = vmatpush1.bf16.msra.mxu0 0
  %449 = vmatprep.subr.bf16.mxu0 0
  %450 = vmatpush1.bf16.msra.mxu0 0
  %451 = vmatprep.mubr.bf16.mxu0 0
  %452 = vmatmul.mubr.bf16.gmra.mrb[0].mxu0 %v282
  %v453 = vpop.f32.mrb[0].mxu0
  %v454 = vadd.f32 %v68, %v453
  %v455 = vpop.f32.mrb[0].mxu0
  %v456 = vadd.f32 %v68, %v455
  %v457 = vpop.f32.mrb[0].mxu0
  %v458 = vadd.f32 %v73, %v457
  %v459 = vpop.f32.mrb[0].mxu0
  %v460 = vadd.f32 %v73, %v459
  %461 = vdwg.mxu0
  %462 = vmatprep.subr.bf16.mxu0 %v207
  %463 = vmatpush1.bf16.msra.mxu0 %v206
  %464 = vmatprep.subr.bf16.mxu0 %v223
  %465 = vmatpush1.bf16.msra.mxu0 %v222
  %466 = vmatprep.subr.bf16.mxu0 %v307
  %467 = vmatpush1.bf16.msra.mxu0 %v304
  %468 = vmatprep.subr.bf16.mxu0 0
  %469 = vmatpush1.bf16.msra.mxu0 0
  %470 = vmatprep.subr.bf16.mxu0 0
  %471 = vmatpush1.bf16.msra.mxu0 0
  %472 = vmatprep.subr.bf16.mxu0 0
  %473 = vmatpush1.bf16.msra.mxu0 0
  %474 = vmatprep.subr.bf16.mxu0 0
  %475 = vmatpush1.bf16.msra.mxu0 0
  %476 = vmatprep.subr.bf16.mxu0 0
  %477 = vmatpush1.bf16.msra.mxu0 0
  %478 = vmatprep.subr.bf16.mxu0 0
  %479 = vmatpush1.bf16.msra.mxu0 0
  %480 = vmatprep.subr.bf16.mxu0 0
  %481 = vmatpush1.bf16.msra.mxu0 0
  %482 = vmatprep.subr.bf16.mxu0 0
  %483 = vmatpush1.bf16.msra.mxu0 0
  %484 = vmatprep.subr.bf16.mxu0 0
  %485 = vmatpush1.bf16.msra.mxu0 0
  %486 = vmatprep.subr.bf16.mxu0 0
  %487 = vmatpush1.bf16.msra.mxu0 0
  %488 = vmatprep.subr.bf16.mxu0 0
  %489 = vmatpush1.bf16.msra.mxu0 0
  %490 = vmatprep.subr.bf16.mxu0 0
  %491 = vmatpush1.bf16.msra.mxu0 0
  %492 = vmatprep.subr.bf16.mxu0 0
  %493 = vmatpush1.bf16.msra.mxu0 0
  %494 = vmatprep.mubr.bf16.mxu0 0
  %495 = vmatmul.mubr.bf16.gmra.mrb[0].mxu0 %v282
  %v496 = vpop.f32.mrb[0].mxu0
  %v497 = vadd.f32 %v68, %v496
  %v498 = vpop.f32.mrb[0].mxu0
  %v499 = vadd.f32 %v68, %v498
  %v500 = vpop.f32.mrb[0].mxu0
  %v501 = vadd.f32 %v73, %v500
  %v502 = vpop.f32.mrb[0].mxu0
  %v503 = vadd.f32 %v73, %v502
  %504 = vdwg.mxu0
  %505 = vmatprep.subr.bf16.mxu0 %v209
  %506 = vmatpush1.bf16.msra.mxu0 %v208
  %507 = vmatprep.subr.bf16.mxu0 %v225
  %508 = vmatpush1.bf16.msra.mxu0 %v224
  %509 = vmatprep.subr.bf16.mxu0 %v313
  %510 = vmatpush1.bf16.msra.mxu0 %v310
  %511 = vmatprep.subr.bf16.mxu0 0
  %512 = vmatpush1.bf16.msra.mxu0 0
  %513 = vmatprep.subr.bf16.mxu0 0
  %514 = vmatpush1.bf16.msra.mxu0 0
  %515 = vmatprep.subr.bf16.mxu0 0
  %516 = vmatpush1.bf16.msra.mxu0 0
  %517 = vmatprep.subr.bf16.mxu0 0
  %518 = vmatpush1.bf16.msra.mxu0 0
  %519 = vmatprep.subr.bf16.mxu0 0
  %520 = vmatpush1.bf16.msra.mxu0 0
  %521 = vmatprep.subr.bf16.mxu0 0
  %522 = vmatpush1.bf16.msra.mxu0 0
  %523 = vmatprep.subr.bf16.mxu0 0
  %524 = vmatpush1.bf16.msra.mxu0 0
  %525 = vmatprep.subr.bf16.mxu0 0
  %526 = vmatpush1.bf16.msra.mxu0 0
  %527 = vmatprep.subr.bf16.mxu0 0
  %528 = vmatpush1.bf16.msra.mxu0 0
  %529 = vmatprep.subr.bf16.mxu0 0
  %530 = vmatpush1.bf16.msra.mxu0 0
  %531 = vmatprep.subr.bf16.mxu0 0
  %532 = vmatpush1.bf16.msra.mxu0 0
  %533 = vmatprep.subr.bf16.mxu0 0
  %534 = vmatpush1.bf16.msra.mxu0 0
  %535 = vmatprep.subr.bf16.mxu0 0
  %536 = vmatpush1.bf16.msra.mxu0 0
  %537 = vmatprep.mubr.bf16.mxu0 0
  %538 = vmatmul.mubr.bf16.gmra.mrb[0].mxu0 %v282
  %v539 = vpop.f32.mrb[0].mxu0
  %v540 = vadd.f32 %v68, %v539
  %v541 = vpop.f32.mrb[0].mxu0
  %v542 = vadd.f32 %v68, %v541
  %v543 = vpop.f32.mrb[0].mxu0
  %v544 = vadd.f32 %v73, %v543
  %v545 = vpop.f32.mrb[0].mxu0
  %v546 = vadd.f32 %v73, %v545
  %547 = vdwg.mxu0
  %548 = vmatprep.subr.bf16.mxu0 %v211
  %549 = vmatpush1.bf16.msra.mxu0 %v210
  %550 = vmatprep.subr.bf16.mxu0 %v227
  %551 = vmatpush1.bf16.msra.mxu0 %v226
  %552 = vmatprep.subr.bf16.mxu0 %v319
  %553 = vmatpush1.bf16.msra.mxu0 %v316
  %554 = vmatprep.subr.bf16.mxu0 0
  %555 = vmatpush1.bf16.msra.mxu0 0
  %556 = vmatprep.subr.bf16.mxu0 0
  %557 = vmatpush1.bf16.msra.mxu0 0
  %558 = vmatprep.subr.bf16.mxu0 0
  %559 = vmatpush1.bf16.msra.mxu0 0
  %560 = vmatprep.subr.bf16.mxu0 0
  %561 = vmatpush1.bf16.msra.mxu0 0
  %562 = vmatprep.subr.bf16.mxu0 0
  %563 = vmatpush1.bf16.msra.mxu0 0
  %564 = vmatprep.subr.bf16.mxu0 0
  %565 = vmatpush1.bf16.msra.mxu0 0
  %566 = vmatprep.subr.bf16.mxu0 0
  %567 = vmatpush1.bf16.msra.mxu0 0
  %568 = vmatprep.subr.bf16.mxu0 0
  %569 = vmatpush1.bf16.msra.mxu0 0
  %570 = vmatprep.subr.bf16.mxu0 0
  %571 = vmatpush1.bf16.msra.mxu0 0
  %572 = vmatprep.subr.bf16.mxu0 0
  %573 = vmatpush1.bf16.msra.mxu0 0
  %574 = vmatprep.subr.bf16.mxu0 0
  %575 = vmatpush1.bf16.msra.mxu0 0
  %576 = vmatprep.subr.bf16.mxu0 0
  %577 = vmatpush1.bf16.msra.mxu0 0
  %578 = vmatprep.subr.bf16.mxu0 0
  %579 = vmatpush1.bf16.msra.mxu0 0
  %580 = vmatprep.mubr.bf16.mxu0 0
  %581 = vmatmul.mubr.bf16.gmra.mrb[0].mxu0 %v282
  %v582 = vpop.f32.mrb[0].mxu0
  %v583 = vadd.f32 %v68, %v582
  %v584 = vpop.f32.mrb[0].mxu0
  %v585 = vadd.f32 %v68, %v584
  %v586 = vpop.f32.mrb[0].mxu0
  %v587 = vadd.f32 %v73, %v586
  %v588 = vpop.f32.mrb[0].mxu0
  %v589 = vadd.f32 %v73, %v588
  %590 = vdwg.mxu0
  %591 = vmatprep.subr.bf16.mxu0 %v213
  %592 = vmatpush1.bf16.msra.mxu0 %v212
  %593 = vmatprep.subr.bf16.mxu0 %v229
  %594 = vmatpush1.bf16.msra.mxu0 %v228
  %595 = vmatprep.subr.bf16.mxu0 %v325
  %596 = vmatpush1.bf16.msra.mxu0 %v322
  %597 = vmatprep.subr.bf16.mxu0 0
  %598 = vmatpush1.bf16.msra.mxu0 0
  %599 = vmatprep.subr.bf16.mxu0 0
  %600 = vmatpush1.bf16.msra.mxu0 0
  %601 = vmatprep.subr.bf16.mxu0 0
  %602 = vmatpush1.bf16.msra.mxu0 0
  %603 = vmatprep.subr.bf16.mxu0 0
  %604 = vmatpush1.bf16.msra.mxu0 0
  %605 = vmatprep.subr.bf16.mxu0 0
  %606 = vmatpush1.bf16.msra.mxu0 0
  %607 = vmatprep.subr.bf16.mxu0 0
  %608 = vmatpush1.bf16.msra.mxu0 0
  %609 = vmatprep.subr.bf16.mxu0 0
  %610 = vmatpush1.bf16.msra.mxu0 0
  %611 = vmatprep.subr.bf16.mxu0 0
  %612 = vmatpush1.bf16.msra.mxu0 0
  %613 = vmatprep.subr.bf16.mxu0 0
  %614 = vmatpush1.bf16.msra.mxu0 0
  %615 = vmatprep.subr.bf16.mxu0 0
  %616 = vmatpush1.bf16.msra.mxu0 0
  %617 = vmatprep.subr.bf16.mxu0 0
  %618 = vmatpush1.bf16.msra.mxu0 0
  %619 = vmatprep.subr.bf16.mxu0 0
  %620 = vmatpush1.bf16.msra.mxu0 0
  %621 = vmatprep.subr.bf16.mxu0 0
  %622 = vmatpush1.bf16.msra.mxu0 0
  %623 = vmatprep.mubr.bf16.mxu0 0
  %624 = vmatmul.mubr.bf16.gmra.mrb[0].mxu0 %v282
  %v625 = vpop.f32.mrb[0].mxu0
  %v626 = vadd.f32 %v68, %v625
  %v627 = vpop.f32.mrb[0].mxu0
  %v628 = vadd.f32 %v68, %v627
  %v629 = vpop.f32.mrb[0].mxu0
  %v630 = vadd.f32 %v73, %v629
  %v631 = vpop.f32.mrb[0].mxu0
  %v632 = vadd.f32 %v73, %v631
  %633 = vdwg.mxu0
  %634 = vmatprep.subr.bf16.mxu0 %v215
  %635 = vmatpush1.bf16.msra.mxu0 %v214
  %636 = vmatprep.subr.bf16.mxu0 %v231
  %637 = vmatpush1.bf16.msra.mxu0 %v230
  %638 = vmatprep.subr.bf16.mxu0 %v331
  %639 = vmatpush1.bf16.msra.mxu0 %v328
  %640 = vmatprep.subr.bf16.mxu0 0
  %641 = vmatpush1.bf16.msra.mxu0 0
  %642 = vmatprep.subr.bf16.mxu0 0
  %643 = vmatpush1.bf16.msra.mxu0 0
  %644 = vmatprep.subr.bf16.mxu0 0
  %645 = vmatpush1.bf16.msra.mxu0 0
  %646 = vmatprep.subr.bf16.mxu0 0
  %647 = vmatpush1.bf16.msra.mxu0 0
  %648 = vmatprep.subr.bf16.mxu0 0
  %649 = vmatpush1.bf16.msra.mxu0 0
  %650 = vmatprep.subr.bf16.mxu0 0
  %651 = vmatpush1.bf16.msra.mxu0 0
  %652 = vmatprep.subr.bf16.mxu0 0
  %653 = vmatpush1.bf16.msra.mxu0 0
  %654 = vmatprep.subr.bf16.mxu0 0
  %655 = vmatpush1.bf16.msra.mxu0 0
  %656 = vmatprep.subr.bf16.mxu0 0
  %657 = vmatpush1.bf16.msra.mxu0 0
  %658 = vmatprep.subr.bf16.mxu0 0
  %659 = vmatpush1.bf16.msra.mxu0 0
  %660 = vmatprep.subr.bf16.mxu0 0
  %661 = vmatpush1.bf16.msra.mxu0 0
  %662 = vmatprep.subr.bf16.mxu0 0
  %663 = vmatpush1.bf16.msra.mxu0 0
  %664 = vmatprep.subr.bf16.mxu0 0
  %665 = vmatpush1.bf16.msra.mxu0 0
  %666 = vmatprep.mubr.bf16.mxu0 0
  %667 = vmatmul.mubr.bf16.gmra.mrb[0].mxu0 %v282
  %v668 = vpop.f32.mrb[0].mxu0
  %v669 = vadd.f32 %v68, %v668
  %v670 = vpop.f32.mrb[0].mxu0
  %v671 = vadd.f32 %v68, %v670
  %v672 = vpop.f32.mrb[0].mxu0
  %v673 = vadd.f32 %v73, %v672
  %v674 = vpop.f32.mrb[0].mxu0
  %v675 = vadd.f32 %v73, %v674
  %676 = vdwg.mxu0
  %v677 = vmax.f32 %v368, 0.0
  %v678 = vmax.f32 %v370, 0.0
  %v679 = vmax.f32 %v411, 0.0
  %v680 = vmax.f32 %v413, 0.0
  %v681 = vmax.f32 %v454, 0.0
  %v682 = vmax.f32 %v456, 0.0
  %v683 = vmax.f32 %v497, 0.0
  %v684 = vmax.f32 %v499, 0.0
  %v685 = vmax.f32 %v540, 0.0
  %v686 = vmax.f32 %v542, 0.0
  %v687 = vmax.f32 %v583, 0.0
  %v688 = vmax.f32 %v585, 0.0
  %v689 = vmax.f32 %v626, 0.0
  %v690 = vmax.f32 %v628, 0.0
  %v691 = vmax.f32 %v669, 0.0
  %v692 = vmax.f32 %v671, 0.0
  %v693 = vmax.f32 %v372, 0.0
  %v694 = vmax.f32 %v374, 0.0
  %v695 = vmax.f32 %v415, 0.0
  %v696 = vmax.f32 %v417, 0.0
  %v697 = vmax.f32 %v458, 0.0
  %v698 = vmax.f32 %v460, 0.0
  %v699 = vmax.f32 %v501, 0.0
  %v700 = vmax.f32 %v503, 0.0
  %v701 = vmax.f32 %v544, 0.0
  %v702 = vmax.f32 %v546, 0.0
  %v703 = vmax.f32 %v587, 0.0
  %v704 = vmax.f32 %v589, 0.0
  %v705 = vmax.f32 %v630, 0.0
  %v706 = vmax.f32 %v632, 0.0
  %v707 = vmax.f32 %v673, 0.0
  %v708 = vmax.f32 %v675, 0.0
  %v709 = vld [vmem:[%s3] sm:$0xff]
  %v710 = vld [vmem:[%s3 + $0x8] sm:$0xff]
  %v711 = vld [vmem:[%s3 + $0x10] sm:$0xff]
  %v712 = vld [vmem:[%s3 + $0x18] sm:$0xff]
  %v713 = vld [vmem:[%s3 + $0x20] sm:$0xff]
  %v714 = vld [vmem:[%s3 + $0x28] sm:$0xff]
  %v715 = vld [vmem:[%s3 + $0x30] sm:$0xff]
  %v716 = vld [vmem:[%s3 + $0x38] sm:$0xff]
  %v717 = vld [vmem:[%s3 + $0x40] sm:$0xff]
  %v718 = vld [vmem:[%s3 + $0x48] sm:$0xff]
  %v719 = vld [vmem:[%s3 + $0x50] sm:$0xff]
  %v720 = vld [vmem:[%s3 + $0x58] sm:$0xff]
  %v721 = vld [vmem:[%s3 + $0x60] sm:$0xff]
  %v722 = vld [vmem:[%s3 + $0x68] sm:$0xff]
  %v723 = vld [vmem:[%s3 + $0x70] sm:$0xff]
  %v724 = vld [vmem:[%s3 + $0x78] sm:$0xff]
  %v725 = vld [vmem:[%s3 + $0x80] sm:$0xff]
  %v726 = vld [vmem:[%s3 + $0x88] sm:$0xff]
  %v727 = vld [vmem:[%s3 + $0x90] sm:$0xff]
  %v728 = vld [vmem:[%s3 + $0x98] sm:$0xff]
  %v729 = vld [vmem:[%s3 + $0xa0] sm:$0xff]
  %v730 = vld [vmem:[%s3 + $0xa8] sm:$0xff]
  %v731 = vld [vmem:[%s3 + $0xb0] sm:$0xff]
  %v732 = vld [vmem:[%s3 + $0xb8] sm:$0xff]
  %v733 = vld [vmem:[%s3 + $0xc0] sm:$0xff]
  %v734 = vld [vmem:[%s3 + $0xc8] sm:$0xff]
  %v735 = vld [vmem:[%s3 + $0xd0] sm:$0xff]
  %v736 = vld [vmem:[%s3 + $0xd8] sm:$0xff]
  %v737 = vld [vmem:[%s3 + $0xe0] sm:$0xff]
  %v738 = vld [vmem:[%s3 + $0xe8] sm:$0xff]
  %v739 = vld [vmem:[%s3 + $0xf0] sm:$0xff]
  %v740 = vld [vmem:[%s3 + $0xf8] sm:$0xff]
  %v741 = vld [vmem:[%s3 + $0x100] sm:$0xff]
  %v742 = vld [vmem:[%s3 + $0x108] sm:$0xff]
  %v743 = vld [vmem:[%s3 + $0x110] sm:$0xff]
  %v744 = vld [vmem:[%s3 + $0x118] sm:$0xff]
  %v745 = vld [vmem:[%s3 + $0x120] sm:$0xff]
  %v746 = vld [vmem:[%s3 + $0x128] sm:$0xff]
  %v747 = vld [vmem:[%s3 + $0x130] sm:$0xff]
  %v748 = vld [vmem:[%s3 + $0x138] sm:$0xff]
  %v749 = vld [vmem:[%s3 + $0x140] sm:$0xff]
  %v750 = vld [vmem:[%s3 + $0x148] sm:$0xff]
  %v751 = vld [vmem:[%s3 + $0x150] sm:$0xff]
  %v752 = vld [vmem:[%s3 + $0x158] sm:$0xff]
  %v753 = vld [vmem:[%s3 + $0x160] sm:$0xff]
  %v754 = vld [vmem:[%s3 + $0x168] sm:$0xff]
  %v755 = vld [vmem:[%s3 + $0x170] sm:$0xff]
  %v756 = vld [vmem:[%s3 + $0x178] sm:$0xff]
  %v757 = vld [vmem:[%s3 + $0x180] sm:$0xff]
  %v758 = vld [vmem:[%s3 + $0x188] sm:$0xff]
  %v759 = vld [vmem:[%s3 + $0x190] sm:$0xff]
  %v760 = vld [vmem:[%s3 + $0x198] sm:$0xff]
  %v761 = vld [vmem:[%s3 + $0x1a0] sm:$0xff]
  %v762 = vld [vmem:[%s3 + $0x1a8] sm:$0xff]
  %v763 = vld [vmem:[%s3 + $0x1b0] sm:$0xff]
  %v764 = vld [vmem:[%s3 + $0x1b8] sm:$0xff]
  %v765 = vunpack.c.l.bf16 %v709
  %v766 = vunpack.c.h.bf16 %v709
  %v767 = vunpack.c.l.bf16 %v710
  %v768 = vunpack.c.h.bf16 %v710
  %v769 = vunpack.c.l.bf16 %v711
  %v770 = vunpack.c.h.bf16 %v711
  %v771 = vunpack.c.l.bf16 %v712
  %v772 = vunpack.c.h.bf16 %v712
  %v773 = vunpack.c.l.bf16 %v713
  %v774 = vunpack.c.h.bf16 %v713
  %v775 = vunpack.c.l.bf16 %v714
  %v776 = vunpack.c.h.bf16 %v714
  %v777 = vunpack.c.l.bf16 %v715
  %v778 = vunpack.c.h.bf16 %v715
  %v779 = vunpack.c.l.bf16 %v716
  %v780 = vunpack.c.h.bf16 %v716
  %v781 = vunpack.c.l.bf16 %v717
  %v782 = vunpack.c.h.bf16 %v717
  %v783 = vunpack.c.l.bf16 %v718
  %v784 = vunpack.c.h.bf16 %v718
  %v785 = vunpack.c.l.bf16 %v719
  %v786 = vunpack.c.h.bf16 %v719
  %v787 = vunpack.c.l.bf16 %v720
  %v788 = vunpack.c.h.bf16 %v720
  %v789 = vunpack.c.l.bf16 %v721
  %v790 = vunpack.c.h.bf16 %v721
  %v791 = vunpack.c.l.bf16 %v722
  %v792 = vunpack.c.h.bf16 %v722
  %v793 = vunpack.c.l.bf16 %v723
  %v794 = vunpack.c.h.bf16 %v723
  %v795 = vunpack.c.l.bf16 %v724
  %v796 = vunpack.c.h.bf16 %v724
  %v797 = vunpack.c.l.bf16 %v725
  %v798 = vunpack.c.h.bf16 %v725
  %v799 = vunpack.c.l.bf16 %v726
  %v800 = vunpack.c.h.bf16 %v726
  %v801 = vunpack.c.l.bf16 %v727
  %v802 = vunpack.c.h.bf16 %v727
  %v803 = vunpack.c.l.bf16 %v728
  %v804 = vunpack.c.h.bf16 %v728
  %v805 = vunpack.c.l.bf16 %v729
  %v806 = vunpack.c.h.bf16 %v729
  %v807 = vunpack.c.l.bf16 %v730
  %v808 = vunpack.c.h.bf16 %v730
  %v809 = vunpack.c.l.bf16 %v731
  %v810 = vunpack.c.h.bf16 %v731
  %v811 = vunpack.c.l.bf16 %v732
  %v812 = vunpack.c.h.bf16 %v732
  %v813 = vunpack.c.l.bf16 %v733
  %v814 = vunpack.c.h.bf16 %v733
  %v815 = vunpack.c.l.bf16 %v734
  %v816 = vunpack.c.h.bf16 %v734
  %v817 = vunpack.c.l.bf16 %v735
  %v818 = vunpack.c.h.bf16 %v735
  %v819 = vunpack.c.l.bf16 %v736
  %v820 = vunpack.c.h.bf16 %v736
  %v821 = vunpack.c.l.bf16 %v737
  %v822 = vunpack.c.h.bf16 %v737
  %v823 = vunpack.c.l.bf16 %v738
  %v824 = vunpack.c.h.bf16 %v738
  %v825 = vunpack.c.l.bf16 %v739
  %v826 = vunpack.c.h.bf16 %v739
  %v827 = vunpack.c.l.bf16 %v740
  %v828 = vunpack.c.h.bf16 %v740
  %v829 = vunpack.c.l.bf16 %v741
  %v830 = vunpack.c.h.bf16 %v741
  %v831 = vunpack.c.l.bf16 %v742
  %v832 = vunpack.c.h.bf16 %v742
  %v833 = vunpack.c.l.bf16 %v743
  %v834 = vunpack.c.h.bf16 %v743
  %v835 = vunpack.c.l.bf16 %v744
  %v836 = vunpack.c.h.bf16 %v744
  %v837 = vunpack.c.l.bf16 %v745
  %v838 = vunpack.c.h.bf16 %v745
  %v839 = vunpack.c.l.bf16 %v746
  %v840 = vunpack.c.h.bf16 %v746
  %v841 = vunpack.c.l.bf16 %v747
  %v842 = vunpack.c.h.bf16 %v747
  %v843 = vunpack.c.l.bf16 %v748
  %v844 = vunpack.c.h.bf16 %v748
  %v845 = vunpack.c.l.bf16 %v749
  %v846 = vunpack.c.h.bf16 %v749
  %v847 = vunpack.c.l.bf16 %v750
  %v848 = vunpack.c.h.bf16 %v750
  %v849 = vunpack.c.l.bf16 %v751
  %v850 = vunpack.c.h.bf16 %v751
  %v851 = vunpack.c.l.bf16 %v752
  %v852 = vunpack.c.h.bf16 %v752
  %v853 = vunpack.c.l.bf16 %v753
  %v854 = vunpack.c.h.bf16 %v753
  %v855 = vunpack.c.l.bf16 %v754
  %v856 = vunpack.c.h.bf16 %v754
  %v857 = vunpack.c.l.bf16 %v755
  %v858 = vunpack.c.h.bf16 %v755
  %v859 = vunpack.c.l.bf16 %v756
  %v860 = vunpack.c.h.bf16 %v756
  %v861 = vunpack.c.l.bf16 %v757
  %v862 = vunpack.c.h.bf16 %v757
  %v863 = vunpack.c.l.bf16 %v758
  %v864 = vunpack.c.h.bf16 %v758
  %v865 = vunpack.c.l.bf16 %v759
  %v866 = vunpack.c.h.bf16 %v759
  %v867 = vunpack.c.l.bf16 %v760
  %v868 = vunpack.c.h.bf16 %v760
  %v869 = vunpack.c.l.bf16 %v761
  %v870 = vunpack.c.h.bf16 %v761
  %v871 = vunpack.c.l.bf16 %v762
  %v872 = vunpack.c.h.bf16 %v762
  %v873 = vunpack.c.l.bf16 %v763
  %v874 = vunpack.c.h.bf16 %v763
  %v875 = vunpack.c.l.bf16 %v764
  %v876 = vunpack.c.h.bf16 %v764
  %v877 = vmul.f32 %v677, %v765
  %v878 = vmul.f32 %v678, %v766
  %v879 = vmul.f32 %v679, %v767
  %v880 = vmul.f32 %v680, %v768
  %v881 = vmul.f32 %v681, %v769
  %v882 = vmul.f32 %v682, %v770
  %v883 = vmul.f32 %v683, %v771
  %v884 = vmul.f32 %v684, %v772
  %v885 = vmul.f32 %v693, %v773
  %v886 = vmul.f32 %v694, %v774
  %v887 = vmul.f32 %v695, %v775
  %v888 = vmul.f32 %v696, %v776
  %v889 = vmul.f32 %v697, %v777
  %v890 = vmul.f32 %v698, %v778
  %v891 = vmul.f32 %v699, %v779
  %v892 = vmul.f32 %v700, %v780
  %v893 = vmul.f32 %v677, %v781
  %v894 = vmul.f32 %v678, %v782
  %v895 = vmul.f32 %v679, %v783
  %v896 = vmul.f32 %v680, %v784
  %v897 = vmul.f32 %v681, %v785
  %v898 = vmul.f32 %v682, %v786
  %v899 = vmul.f32 %v683, %v787
  %v900 = vmul.f32 %v684, %v788
  %v901 = vmul.f32 %v693, %v789
  %v902 = vmul.f32 %v694, %v790
  %v903 = vmul.f32 %v695, %v791
  %v904 = vmul.f32 %v696, %v792
  %v905 = vmul.f32 %v697, %v793
  %v906 = vmul.f32 %v698, %v794
  %v907 = vmul.f32 %v699, %v795
  %v908 = vmul.f32 %v700, %v796
  %v909 = vmul.f32 %v677, %v797
  %v910 = vmul.f32 %v678, %v798
  %v911 = vmul.f32 %v679, %v799
  %v912 = vmul.f32 %v680, %v800
  %v913 = vmul.f32 %v681, %v801
  %v914 = vmul.f32 %v682, %v802
  %v915 = vmul.f32 %v683, %v803
  %v916 = vmul.f32 %v684, %v804
  %v917 = vmul.f32 %v693, %v805
  %v918 = vmul.f32 %v694, %v806
  %v919 = vmul.f32 %v695, %v807
  %v920 = vmul.f32 %v696, %v808
  %v921 = vmul.f32 %v697, %v809
  %v922 = vmul.f32 %v698, %v810
  %v923 = vmul.f32 %v699, %v811
  %v924 = vmul.f32 %v700, %v812
  %v925 = vmul.f32 %v677, %v813
  %v926 = vmul.f32 %v678, %v814
  %v927 = vmul.f32 %v679, %v815
  %v928 = vmul.f32 %v680, %v816
  %v929 = vmul.f32 %v681, %v817
  %v930 = vmul.f32 %v682, %v818
  %v931 = vmul.f32 %v683, %v819
  %v932 = vmul.f32 %v684, %v820
  %v933 = vmul.f32 %v693, %v821
  %v934 = vmul.f32 %v694, %v822
  %v935 = vmul.f32 %v695, %v823
  %v936 = vmul.f32 %v696, %v824
  %v937 = vmul.f32 %v697, %v825
  %v938 = vmul.f32 %v698, %v826
  %v939 = vmul.f32 %v699, %v827
  %v940 = vmul.f32 %v700, %v828
  %v941 = vmul.f32 %v677, %v829
  %v942 = vmul.f32 %v678, %v830
  %v943 = vmul.f32 %v679, %v831
  %v944 = vmul.f32 %v680, %v832
  %v945 = vmul.f32 %v681, %v833
  %v946 = vmul.f32 %v682, %v834
  %v947 = vmul.f32 %v683, %v835
  %v948 = vmul.f32 %v684, %v836
  %v949 = vmul.f32 %v693, %v837
  %v950 = vmul.f32 %v694, %v838
  %v951 = vmul.f32 %v695, %v839
  %v952 = vmul.f32 %v696, %v840
  %v953 = vmul.f32 %v697, %v841
  %v954 = vmul.f32 %v698, %v842
  %v955 = vmul.f32 %v699, %v843
  %v956 = vmul.f32 %v700, %v844
  %v957 = vmul.f32 %v677, %v845
  %v958 = vmul.f32 %v678, %v846
  %v959 = vmul.f32 %v679, %v847
  %v960 = vmul.f32 %v680, %v848
  %v961 = vmul.f32 %v681, %v849
  %v962 = vmul.f32 %v682, %v850
  %v963 = vmul.f32 %v683, %v851
  %v964 = vmul.f32 %v684, %v852
  %v965 = vmul.f32 %v693, %v853
  %v966 = vmul.f32 %v694, %v854
  %v967 = vmul.f32 %v695, %v855
  %v968 = vmul.f32 %v696, %v856
  %v969 = vmul.f32 %v697, %v857
  %v970 = vmul.f32 %v698, %v858
  %v971 = vmul.f32 %v699, %v859
  %v972 = vmul.f32 %v700, %v860
  %v973 = vmul.f32 %v677, %v861
  %v974 = vmul.f32 %v678, %v862
  %v975 = vmul.f32 %v679, %v863
  %v976 = vmul.f32 %v680, %v864
  %v977 = vmul.f32 %v681, %v865
  %v978 = vmul.f32 %v682, %v866
  %v979 = vmul.f32 %v683, %v867
  %v980 = vmul.f32 %v684, %v868
  %v981 = vmul.f32 %v693, %v869
  %v982 = vmul.f32 %v694, %v870
  %v983 = vmul.f32 %v695, %v871
  %v984 = vmul.f32 %v696, %v872
  %v985 = vmul.f32 %v697, %v873
  %v986 = vmul.f32 %v698, %v874
  %v987 = vmul.f32 %v699, %v875
  %v988 = vmul.f32 %v700, %v876
  %v989 = vadd.f32 %v877, %v885
  %v990 = vrot.slane %v989, 4
  %v991 = vadd.f32 %v989, %v990
  %v992 = vrot.slane %v991, 2
  %v993 = vadd.f32 %v991, %v992
  %v994 = vrot.slane %v993, 1
  %v995 = vadd.f32 %v993, %v994
  %v996 = vadd.f32 %v878, %v886
  %v997 = vrot.slane %v996, 4
  %v998 = vadd.f32 %v996, %v997
  %v999 = vrot.slane %v998, 2
  %v1000 = vadd.f32 %v998, %v999
  %v1001 = vrot.slane %v1000, 1
  %v1002 = vadd.f32 %v1000, %v1001
  %v1003 = vadd.f32 %v879, %v887
  %v1004 = vrot.slane %v1003, 4
  %v1005 = vadd.f32 %v1003, %v1004
  %v1006 = vrot.slane %v1005, 2
  %v1007 = vadd.f32 %v1005, %v1006
  %v1008 = vrot.slane %v1007, 1
  %v1009 = vadd.f32 %v1007, %v1008
  %v1010 = vadd.f32 %v880, %v888
  %v1011 = vrot.slane %v1010, 4
  %v1012 = vadd.f32 %v1010, %v1011
  %v1013 = vrot.slane %v1012, 2
  %v1014 = vadd.f32 %v1012, %v1013
  %v1015 = vrot.slane %v1014, 1
  %v1016 = vadd.f32 %v1014, %v1015
  %v1017 = vadd.f32 %v881, %v889
  %v1018 = vrot.slane %v1017, 4
  %v1019 = vadd.f32 %v1017, %v1018
  %v1020 = vrot.slane %v1019, 2
  %v1021 = vadd.f32 %v1019, %v1020
  %v1022 = vrot.slane %v1021, 1
  %v1023 = vadd.f32 %v1021, %v1022
  %v1024 = vadd.f32 %v882, %v890
  %v1025 = vrot.slane %v1024, 4
  %v1026 = vadd.f32 %v1024, %v1025
  %v1027 = vrot.slane %v1026, 2
  %v1028 = vadd.f32 %v1026, %v1027
  %v1029 = vrot.slane %v1028, 1
  %v1030 = vadd.f32 %v1028, %v1029
  %v1031 = vadd.f32 %v883, %v891
  %v1032 = vrot.slane %v1031, 4
  %v1033 = vadd.f32 %v1031, %v1032
  %v1034 = vrot.slane %v1033, 2
  %v1035 = vadd.f32 %v1033, %v1034
  %v1036 = vrot.slane %v1035, 1
  %v1037 = vadd.f32 %v1035, %v1036
  %v1038 = vadd.f32 %v884, %v892
  %v1039 = vrot.slane %v1038, 4
  %v1040 = vadd.f32 %v1038, %v1039
  %v1041 = vrot.slane %v1040, 2
  %v1042 = vadd.f32 %v1040, %v1041
  %v1043 = vrot.slane %v1042, 1
  %v1044 = vadd.f32 %v1042, %v1043
  %v1045 = vadd.f32 %v893, %v901
  %v1046 = vrot.slane %v1045, 4
  %v1047 = vadd.f32 %v1045, %v1046
  %v1048 = vrot.slane %v1047, 2
  %v1049 = vadd.f32 %v1047, %v1048
  %v1050 = vrot.slane %v1049, 1
  %v1051 = vadd.f32 %v1049, %v1050
  %v1052 = vadd.f32 %v894, %v902
  %v1053 = vrot.slane %v1052, 4
  %v1054 = vadd.f32 %v1052, %v1053
  %v1055 = vrot.slane %v1054, 2
  %v1056 = vadd.f32 %v1054, %v1055
  %v1057 = vrot.slane %v1056, 1
  %v1058 = vadd.f32 %v1056, %v1057
  %v1059 = vadd.f32 %v895, %v903
  %v1060 = vrot.slane %v1059, 4
  %v1061 = vadd.f32 %v1059, %v1060
  %v1062 = vrot.slane %v1061, 2
  %v1063 = vadd.f32 %v1061, %v1062
  %v1064 = vrot.slane %v1063, 1
  %v1065 = vadd.f32 %v1063, %v1064
  %v1066 = vadd.f32 %v896, %v904
  %v1067 = vrot.slane %v1066, 4
  %v1068 = vadd.f32 %v1066, %v1067
  %v1069 = vrot.slane %v1068, 2
  %v1070 = vadd.f32 %v1068, %v1069
  %v1071 = vrot.slane %v1070, 1
  %v1072 = vadd.f32 %v1070, %v1071
  %v1073 = vadd.f32 %v897, %v905
  %v1074 = vrot.slane %v1073, 4
  %v1075 = vadd.f32 %v1073, %v1074
  %v1076 = vrot.slane %v1075, 2
  %v1077 = vadd.f32 %v1075, %v1076
  %v1078 = vrot.slane %v1077, 1
  %v1079 = vadd.f32 %v1077, %v1078
  %v1080 = vadd.f32 %v898, %v906
  %v1081 = vrot.slane %v1080, 4
  %v1082 = vadd.f32 %v1080, %v1081
  %v1083 = vrot.slane %v1082, 2
  %v1084 = vadd.f32 %v1082, %v1083
  %v1085 = vrot.slane %v1084, 1
  %v1086 = vadd.f32 %v1084, %v1085
  %v1087 = vadd.f32 %v899, %v907
  %v1088 = vrot.slane %v1087, 4
  %v1089 = vadd.f32 %v1087, %v1088
  %v1090 = vrot.slane %v1089, 2
  %v1091 = vadd.f32 %v1089, %v1090
  %v1092 = vrot.slane %v1091, 1
  %v1093 = vadd.f32 %v1091, %v1092
  %v1094 = vadd.f32 %v900, %v908
  %v1095 = vrot.slane %v1094, 4
  %v1096 = vadd.f32 %v1094, %v1095
  %v1097 = vrot.slane %v1096, 2
  %v1098 = vadd.f32 %v1096, %v1097
  %v1099 = vrot.slane %v1098, 1
  %v1100 = vadd.f32 %v1098, %v1099
  %v1101 = vadd.f32 %v909, %v917
  %v1102 = vrot.slane %v1101, 4
  %v1103 = vadd.f32 %v1101, %v1102
  %v1104 = vrot.slane %v1103, 2
  %v1105 = vadd.f32 %v1103, %v1104
  %v1106 = vrot.slane %v1105, 1
  %v1107 = vadd.f32 %v1105, %v1106
  %v1108 = vadd.f32 %v910, %v918
  %v1109 = vrot.slane %v1108, 4
  %v1110 = vadd.f32 %v1108, %v1109
  %v1111 = vrot.slane %v1110, 2
  %v1112 = vadd.f32 %v1110, %v1111
  %v1113 = vrot.slane %v1112, 1
  %v1114 = vadd.f32 %v1112, %v1113
  %v1115 = vadd.f32 %v911, %v919
  %v1116 = vrot.slane %v1115, 4
  %v1117 = vadd.f32 %v1115, %v1116
  %v1118 = vrot.slane %v1117, 2
  %v1119 = vadd.f32 %v1117, %v1118
  %v1120 = vrot.slane %v1119, 1
  %v1121 = vadd.f32 %v1119, %v1120
  %v1122 = vadd.f32 %v912, %v920
  %v1123 = vrot.slane %v1122, 4
  %v1124 = vadd.f32 %v1122, %v1123
  %v1125 = vrot.slane %v1124, 2
  %v1126 = vadd.f32 %v1124, %v1125
  %v1127 = vrot.slane %v1126, 1
  %v1128 = vadd.f32 %v1126, %v1127
  %v1129 = vadd.f32 %v913, %v921
  %v1130 = vrot.slane %v1129, 4
  %v1131 = vadd.f32 %v1129, %v1130
  %v1132 = vrot.slane %v1131, 2
  %v1133 = vadd.f32 %v1131, %v1132
  %v1134 = vrot.slane %v1133, 1
  %v1135 = vadd.f32 %v1133, %v1134
  %v1136 = vadd.f32 %v914, %v922
  %v1137 = vrot.slane %v1136, 4
  %v1138 = vadd.f32 %v1136, %v1137
  %v1139 = vrot.slane %v1138, 2
  %v1140 = vadd.f32 %v1138, %v1139
  %v1141 = vrot.slane %v1140, 1
  %v1142 = vadd.f32 %v1140, %v1141
  %v1143 = vadd.f32 %v915, %v923
  %v1144 = vrot.slane %v1143, 4
  %v1145 = vadd.f32 %v1143, %v1144
  %v1146 = vrot.slane %v1145, 2
  %v1147 = vadd.f32 %v1145, %v1146
  %v1148 = vrot.slane %v1147, 1
  %v1149 = vadd.f32 %v1147, %v1148
  %v1150 = vadd.f32 %v916, %v924
  %v1151 = vrot.slane %v1150, 4
  %v1152 = vadd.f32 %v1150, %v1151
  %v1153 = vrot.slane %v1152, 2
  %v1154 = vadd.f32 %v1152, %v1153
  %v1155 = vrot.slane %v1154, 1
  %v1156 = vadd.f32 %v1154, %v1155
  %v1157 = vadd.f32 %v925, %v933
  %v1158 = vrot.slane %v1157, 4
  %v1159 = vadd.f32 %v1157, %v1158
  %v1160 = vrot.slane %v1159, 2
  %v1161 = vadd.f32 %v1159, %v1160
  %v1162 = vrot.slane %v1161, 1
  %v1163 = vadd.f32 %v1161, %v1162
  %v1164 = vadd.f32 %v926, %v934
  %v1165 = vrot.slane %v1164, 4
  %v1166 = vadd.f32 %v1164, %v1165
  %v1167 = vrot.slane %v1166, 2
  %v1168 = vadd.f32 %v1166, %v1167
  %v1169 = vrot.slane %v1168, 1
  %v1170 = vadd.f32 %v1168, %v1169
  %v1171 = vadd.f32 %v927, %v935
  %v1172 = vrot.slane %v1171, 4
  %v1173 = vadd.f32 %v1171, %v1172
  %v1174 = vrot.slane %v1173, 2
  %v1175 = vadd.f32 %v1173, %v1174
  %v1176 = vrot.slane %v1175, 1
  %v1177 = vadd.f32 %v1175, %v1176
  %v1178 = vadd.f32 %v928, %v936
  %v1179 = vrot.slane %v1178, 4
  %v1180 = vadd.f32 %v1178, %v1179
  %v1181 = vrot.slane %v1180, 2
  %v1182 = vadd.f32 %v1180, %v1181
  %v1183 = vrot.slane %v1182, 1
  %v1184 = vadd.f32 %v1182, %v1183
  %v1185 = vadd.f32 %v929, %v937
  %v1186 = vrot.slane %v1185, 4
  %v1187 = vadd.f32 %v1185, %v1186
  %v1188 = vrot.slane %v1187, 2
  %v1189 = vadd.f32 %v1187, %v1188
  %v1190 = vrot.slane %v1189, 1
  %v1191 = vadd.f32 %v1189, %v1190
  %v1192 = vadd.f32 %v930, %v938
  %v1193 = vrot.slane %v1192, 4
  %v1194 = vadd.f32 %v1192, %v1193
  %v1195 = vrot.slane %v1194, 2
  %v1196 = vadd.f32 %v1194, %v1195
  %v1197 = vrot.slane %v1196, 1
  %v1198 = vadd.f32 %v1196, %v1197
  %v1199 = vadd.f32 %v931, %v939
  %v1200 = vrot.slane %v1199, 4
  %v1201 = vadd.f32 %v1199, %v1200
  %v1202 = vrot.slane %v1201, 2
  %v1203 = vadd.f32 %v1201, %v1202
  %v1204 = vrot.slane %v1203, 1
  %v1205 = vadd.f32 %v1203, %v1204
  %v1206 = vadd.f32 %v932, %v940
  %v1207 = vrot.slane %v1206, 4
  %v1208 = vadd.f32 %v1206, %v1207
  %v1209 = vrot.slane %v1208, 2
  %v1210 = vadd.f32 %v1208, %v1209
  %v1211 = vrot.slane %v1210, 1
  %v1212 = vadd.f32 %v1210, %v1211
  %v1213 = vadd.f32 %v941, %v949
  %v1214 = vrot.slane %v1213, 4
  %v1215 = vadd.f32 %v1213, %v1214
  %v1216 = vrot.slane %v1215, 2
  %v1217 = vadd.f32 %v1215, %v1216
  %v1218 = vrot.slane %v1217, 1
  %v1219 = vadd.f32 %v1217, %v1218
  %v1220 = vadd.f32 %v942, %v950
  %v1221 = vrot.slane %v1220, 4
  %v1222 = vadd.f32 %v1220, %v1221
  %v1223 = vrot.slane %v1222, 2
  %v1224 = vadd.f32 %v1222, %v1223
  %v1225 = vrot.slane %v1224, 1
  %v1226 = vadd.f32 %v1224, %v1225
  %v1227 = vadd.f32 %v943, %v951
  %v1228 = vrot.slane %v1227, 4
  %v1229 = vadd.f32 %v1227, %v1228
  %v1230 = vrot.slane %v1229, 2
  %v1231 = vadd.f32 %v1229, %v1230
  %v1232 = vrot.slane %v1231, 1
  %v1233 = vadd.f32 %v1231, %v1232
  %v1234 = vadd.f32 %v944, %v952
  %v1235 = vrot.slane %v1234, 4
  %v1236 = vadd.f32 %v1234, %v1235
  %v1237 = vrot.slane %v1236, 2
  %v1238 = vadd.f32 %v1236, %v1237
  %v1239 = vrot.slane %v1238, 1
  %v1240 = vadd.f32 %v1238, %v1239
  %v1241 = vadd.f32 %v945, %v953
  %v1242 = vrot.slane %v1241, 4
  %v1243 = vadd.f32 %v1241, %v1242
  %v1244 = vrot.slane %v1243, 2
  %v1245 = vadd.f32 %v1243, %v1244
  %v1246 = vrot.slane %v1245, 1
  %v1247 = vadd.f32 %v1245, %v1246
  %v1248 = vadd.f32 %v946, %v954
  %v1249 = vrot.slane %v1248, 4
  %v1250 = vadd.f32 %v1248, %v1249
  %v1251 = vrot.slane %v1250, 2
  %v1252 = vadd.f32 %v1250, %v1251
  %v1253 = vrot.slane %v1252, 1
  %v1254 = vadd.f32 %v1252, %v1253
  %v1255 = vadd.f32 %v947, %v955
  %v1256 = vrot.slane %v1255, 4
  %v1257 = vadd.f32 %v1255, %v1256
  %v1258 = vrot.slane %v1257, 2
  %v1259 = vadd.f32 %v1257, %v1258
  %v1260 = vrot.slane %v1259, 1
  %v1261 = vadd.f32 %v1259, %v1260
  %v1262 = vadd.f32 %v948, %v956
  %v1263 = vrot.slane %v1262, 4
  %v1264 = vadd.f32 %v1262, %v1263
  %v1265 = vrot.slane %v1264, 2
  %v1266 = vadd.f32 %v1264, %v1265
  %v1267 = vrot.slane %v1266, 1
  %v1268 = vadd.f32 %v1266, %v1267
  %v1269 = vadd.f32 %v957, %v965
  %v1270 = vrot.slane %v1269, 4
  %v1271 = vadd.f32 %v1269, %v1270
  %v1272 = vrot.slane %v1271, 2
  %v1273 = vadd.f32 %v1271, %v1272
  %v1274 = vrot.slane %v1273, 1
  %v1275 = vadd.f32 %v1273, %v1274
  %v1276 = vadd.f32 %v958, %v966
  %v1277 = vrot.slane %v1276, 4
  %v1278 = vadd.f32 %v1276, %v1277
  %v1279 = vrot.slane %v1278, 2
  %v1280 = vadd.f32 %v1278, %v1279
  %v1281 = vrot.slane %v1280, 1
  %v1282 = vadd.f32 %v1280, %v1281
  %v1283 = vadd.f32 %v959, %v967
  %v1284 = vrot.slane %v1283, 4
  %v1285 = vadd.f32 %v1283, %v1284
  %v1286 = vrot.slane %v1285, 2
  %v1287 = vadd.f32 %v1285, %v1286
  %v1288 = vrot.slane %v1287, 1
  %v1289 = vadd.f32 %v1287, %v1288
  %v1290 = vadd.f32 %v960, %v968
  %v1291 = vrot.slane %v1290, 4
  %v1292 = vadd.f32 %v1290, %v1291
  %v1293 = vrot.slane %v1292, 2
  %v1294 = vadd.f32 %v1292, %v1293
  %v1295 = vrot.slane %v1294, 1
  %v1296 = vadd.f32 %v1294, %v1295
  %v1297 = vadd.f32 %v961, %v969
  %v1298 = vrot.slane %v1297, 4
  %v1299 = vadd.f32 %v1297, %v1298
  %v1300 = vrot.slane %v1299, 2
  %v1301 = vadd.f32 %v1299, %v1300
  %v1302 = vrot.slane %v1301, 1
  %v1303 = vadd.f32 %v1301, %v1302
  %v1304 = vadd.f32 %v962, %v970
  %v1305 = vrot.slane %v1304, 4
  %v1306 = vadd.f32 %v1304, %v1305
  %v1307 = vrot.slane %v1306, 2
  %v1308 = vadd.f32 %v1306, %v1307
  %v1309 = vrot.slane %v1308, 1
  %v1310 = vadd.f32 %v1308, %v1309
  %v1311 = vadd.f32 %v963, %v971
  %v1312 = vrot.slane %v1311, 4
  %v1313 = vadd.f32 %v1311, %v1312
  %v1314 = vrot.slane %v1313, 2
  %v1315 = vadd.f32 %v1313, %v1314
  %v1316 = vrot.slane %v1315, 1
  %v1317 = vadd.f32 %v1315, %v1316
  %v1318 = vadd.f32 %v964, %v972
  %v1319 = vrot.slane %v1318, 4
  %v1320 = vadd.f32 %v1318, %v1319
  %v1321 = vrot.slane %v1320, 2
  %v1322 = vadd.f32 %v1320, %v1321
  %v1323 = vrot.slane %v1322, 1
  %v1324 = vadd.f32 %v1322, %v1323
  %v1325 = vadd.f32 %v973, %v981
  %v1326 = vrot.slane %v1325, 4
  %v1327 = vadd.f32 %v1325, %v1326
  %v1328 = vrot.slane %v1327, 2
  %v1329 = vadd.f32 %v1327, %v1328
  %v1330 = vrot.slane %v1329, 1
  %v1331 = vadd.f32 %v1329, %v1330
  %v1332 = vadd.f32 %v974, %v982
  %v1333 = vrot.slane %v1332, 4
  %v1334 = vadd.f32 %v1332, %v1333
  %v1335 = vrot.slane %v1334, 2
  %v1336 = vadd.f32 %v1334, %v1335
  %v1337 = vrot.slane %v1336, 1
  %v1338 = vadd.f32 %v1336, %v1337
  %v1339 = vadd.f32 %v975, %v983
  %v1340 = vrot.slane %v1339, 4
  %v1341 = vadd.f32 %v1339, %v1340
  %v1342 = vrot.slane %v1341, 2
  %v1343 = vadd.f32 %v1341, %v1342
  %v1344 = vrot.slane %v1343, 1
  %v1345 = vadd.f32 %v1343, %v1344
  %v1346 = vadd.f32 %v976, %v984
  %v1347 = vrot.slane %v1346, 4
  %v1348 = vadd.f32 %v1346, %v1347
  %v1349 = vrot.slane %v1348, 2
  %v1350 = vadd.f32 %v1348, %v1349
  %v1351 = vrot.slane %v1350, 1
  %v1352 = vadd.f32 %v1350, %v1351
  %v1353 = vadd.f32 %v977, %v985
  %v1354 = vrot.slane %v1353, 4
  %v1355 = vadd.f32 %v1353, %v1354
  %v1356 = vrot.slane %v1355, 2
  %v1357 = vadd.f32 %v1355, %v1356
  %v1358 = vrot.slane %v1357, 1
  %v1359 = vadd.f32 %v1357, %v1358
  %v1360 = vadd.f32 %v978, %v986
  %v1361 = vrot.slane %v1360, 4
  %v1362 = vadd.f32 %v1360, %v1361
  %v1363 = vrot.slane %v1362, 2
  %v1364 = vadd.f32 %v1362, %v1363
  %v1365 = vrot.slane %v1364, 1
  %v1366 = vadd.f32 %v1364, %v1365
  %v1367 = vadd.f32 %v979, %v987
  %v1368 = vrot.slane %v1367, 4
  %v1369 = vadd.f32 %v1367, %v1368
  %v1370 = vrot.slane %v1369, 2
  %v1371 = vadd.f32 %v1369, %v1370
  %v1372 = vrot.slane %v1371, 1
  %v1373 = vadd.f32 %v1371, %v1372
  %v1374 = vadd.f32 %v980, %v988
  %v1375 = vrot.slane %v1374, 4
  %v1376 = vadd.f32 %v1374, %v1375
  %v1377 = vrot.slane %v1376, 2
  %v1378 = vadd.f32 %v1376, %v1377
  %v1379 = vrot.slane %v1378, 1
  %v1380 = vadd.f32 %v1378, %v1379
  %v1381 = vmul.f32 %v685, %v765
  %v1382 = vmul.f32 %v686, %v766
  %v1383 = vmul.f32 %v687, %v767
  %v1384 = vmul.f32 %v688, %v768
  %v1385 = vmul.f32 %v689, %v769
  %v1386 = vmul.f32 %v690, %v770
  %v1387 = vmul.f32 %v691, %v771
  %v1388 = vmul.f32 %v692, %v772
  %v1389 = vmul.f32 %v701, %v773
  %v1390 = vmul.f32 %v702, %v774
  %v1391 = vmul.f32 %v703, %v775
  %v1392 = vmul.f32 %v704, %v776
  %v1393 = vmul.f32 %v705, %v777
  %v1394 = vmul.f32 %v706, %v778
  %v1395 = vmul.f32 %v707, %v779
  %v1396 = vmul.f32 %v708, %v780
  %v1397 = vmul.f32 %v685, %v781
  %v1398 = vmul.f32 %v686, %v782
  %v1399 = vmul.f32 %v687, %v783
  %v1400 = vmul.f32 %v688, %v784
  %v1401 = vmul.f32 %v689, %v785
  %v1402 = vmul.f32 %v690, %v786
  %v1403 = vmul.f32 %v691, %v787
  %v1404 = vmul.f32 %v692, %v788
  %v1405 = vmul.f32 %v701, %v789
  %v1406 = vmul.f32 %v702, %v790
  %v1407 = vmul.f32 %v703, %v791
  %v1408 = vmul.f32 %v704, %v792
  %v1409 = vmul.f32 %v705, %v793
  %v1410 = vmul.f32 %v706, %v794
  %v1411 = vmul.f32 %v707, %v795
  %v1412 = vmul.f32 %v708, %v796
  %v1413 = vmul.f32 %v685, %v797
  %v1414 = vmul.f32 %v686, %v798
  %v1415 = vmul.f32 %v687, %v799
  %v1416 = vmul.f32 %v688, %v800
  %v1417 = vmul.f32 %v689, %v801
  %v1418 = vmul.f32 %v690, %v802
  %v1419 = vmul.f32 %v691, %v803
  %v1420 = vmul.f32 %v692, %v804
  %v1421 = vmul.f32 %v701, %v805
  %v1422 = vmul.f32 %v702, %v806
  %v1423 = vmul.f32 %v703, %v807
  %v1424 = vmul.f32 %v704, %v808
  %v1425 = vmul.f32 %v705, %v809
  %v1426 = vmul.f32 %v706, %v810
  %v1427 = vmul.f32 %v707, %v811
  %v1428 = vmul.f32 %v708, %v812
  %v1429 = vmul.f32 %v685, %v813
  %v1430 = vmul.f32 %v686, %v814
  %v1431 = vmul.f32 %v687, %v815
  %v1432 = vmul.f32 %v688, %v816
  %v1433 = vmul.f32 %v689, %v817
  %v1434 = vmul.f32 %v690, %v818
  %v1435 = vmul.f32 %v691, %v819
  %v1436 = vmul.f32 %v692, %v820
  %v1437 = vmul.f32 %v701, %v821
  %v1438 = vmul.f32 %v702, %v822
  %v1439 = vmul.f32 %v703, %v823
  %v1440 = vmul.f32 %v704, %v824
  %v1441 = vmul.f32 %v705, %v825
  %v1442 = vmul.f32 %v706, %v826
  %v1443 = vmul.f32 %v707, %v827
  %v1444 = vmul.f32 %v708, %v828
  %v1445 = vmul.f32 %v685, %v829
  %v1446 = vmul.f32 %v686, %v830
  %v1447 = vmul.f32 %v687, %v831
  %v1448 = vmul.f32 %v688, %v832
  %v1449 = vmul.f32 %v689, %v833
  %v1450 = vmul.f32 %v690, %v834
  %v1451 = vmul.f32 %v691, %v835
  %v1452 = vmul.f32 %v692, %v836
  %v1453 = vmul.f32 %v701, %v837
  %v1454 = vmul.f32 %v702, %v838
  %v1455 = vmul.f32 %v703, %v839
  %v1456 = vmul.f32 %v704, %v840
  %v1457 = vmul.f32 %v705, %v841
  %v1458 = vmul.f32 %v706, %v842
  %v1459 = vmul.f32 %v707, %v843
  %v1460 = vmul.f32 %v708, %v844
  %v1461 = vmul.f32 %v685, %v845
  %v1462 = vmul.f32 %v686, %v846
  %v1463 = vmul.f32 %v687, %v847
  %v1464 = vmul.f32 %v688, %v848
  %v1465 = vmul.f32 %v689, %v849
  %v1466 = vmul.f32 %v690, %v850
  %v1467 = vmul.f32 %v691, %v851
  %v1468 = vmul.f32 %v692, %v852
  %v1469 = vmul.f32 %v701, %v853
  %v1470 = vmul.f32 %v702, %v854
  %v1471 = vmul.f32 %v703, %v855
  %v1472 = vmul.f32 %v704, %v856
  %v1473 = vmul.f32 %v705, %v857
  %v1474 = vmul.f32 %v706, %v858
  %v1475 = vmul.f32 %v707, %v859
  %v1476 = vmul.f32 %v708, %v860
  %v1477 = vmul.f32 %v685, %v861
  %v1478 = vmul.f32 %v686, %v862
  %v1479 = vmul.f32 %v687, %v863
  %v1480 = vmul.f32 %v688, %v864
  %v1481 = vmul.f32 %v689, %v865
  %v1482 = vmul.f32 %v690, %v866
  %v1483 = vmul.f32 %v691, %v867
  %v1484 = vmul.f32 %v692, %v868
  %v1485 = vmul.f32 %v701, %v869
  %v1486 = vmul.f32 %v702, %v870
  %v1487 = vmul.f32 %v703, %v871
  %v1488 = vmul.f32 %v704, %v872
  %v1489 = vmul.f32 %v705, %v873
  %v1490 = vmul.f32 %v706, %v874
  %v1491 = vmul.f32 %v707, %v875
  %v1492 = vmul.f32 %v708, %v876
  %v1493 = vadd.f32 %v1381, %v1389
  %v1494 = vrot.slane %v1493, 4
  %v1495 = vadd.f32 %v1493, %v1494
  %v1496 = vrot.slane %v1495, 2
  %v1497 = vadd.f32 %v1495, %v1496
  %v1498 = vrot.slane %v1497, 1
  %v1499 = vadd.f32 %v1497, %v1498
  %v1500 = vadd.f32 %v1382, %v1390
  %v1501 = vrot.slane %v1500, 4
  %v1502 = vadd.f32 %v1500, %v1501
  %v1503 = vrot.slane %v1502, 2
  %v1504 = vadd.f32 %v1502, %v1503
  %v1505 = vrot.slane %v1504, 1
  %v1506 = vadd.f32 %v1504, %v1505
  %v1507 = vadd.f32 %v1383, %v1391
  %v1508 = vrot.slane %v1507, 4
  %v1509 = vadd.f32 %v1507, %v1508
  %v1510 = vrot.slane %v1509, 2
  %v1511 = vadd.f32 %v1509, %v1510
  %v1512 = vrot.slane %v1511, 1
  %v1513 = vadd.f32 %v1511, %v1512
  %v1514 = vadd.f32 %v1384, %v1392
  %v1515 = vrot.slane %v1514, 4
  %v1516 = vadd.f32 %v1514, %v1515
  %v1517 = vrot.slane %v1516, 2
  %v1518 = vadd.f32 %v1516, %v1517
  %v1519 = vrot.slane %v1518, 1
  %v1520 = vadd.f32 %v1518, %v1519
  %v1521 = vadd.f32 %v1385, %v1393
  %v1522 = vrot.slane %v1521, 4
  %v1523 = vadd.f32 %v1521, %v1522
  %v1524 = vrot.slane %v1523, 2
  %v1525 = vadd.f32 %v1523, %v1524
  %v1526 = vrot.slane %v1525, 1
  %v1527 = vadd.f32 %v1525, %v1526
  %v1528 = vadd.f32 %v1386, %v1394
  %v1529 = vrot.slane %v1528, 4
  %v1530 = vadd.f32 %v1528, %v1529
  %v1531 = vrot.slane %v1530, 2
  %v1532 = vadd.f32 %v1530, %v1531
  %v1533 = vrot.slane %v1532, 1
  %v1534 = vadd.f32 %v1532, %v1533
  %v1535 = vadd.f32 %v1387, %v1395
  %v1536 = vrot.slane %v1535, 4
  %v1537 = vadd.f32 %v1535, %v1536
  %v1538 = vrot.slane %v1537, 2
  %v1539 = vadd.f32 %v1537, %v1538
  %v1540 = vrot.slane %v1539, 1
  %v1541 = vadd.f32 %v1539, %v1540
  %v1542 = vadd.f32 %v1388, %v1396
  %v1543 = vrot.slane %v1542, 4
  %v1544 = vadd.f32 %v1542, %v1543
  %v1545 = vrot.slane %v1544, 2
  %v1546 = vadd.f32 %v1544, %v1545
  %v1547 = vrot.slane %v1546, 1
  %v1548 = vadd.f32 %v1546, %v1547
  %v1549 = vadd.f32 %v1397, %v1405
  %v1550 = vrot.slane %v1549, 4
  %v1551 = vadd.f32 %v1549, %v1550
  %v1552 = vrot.slane %v1551, 2
  %v1553 = vadd.f32 %v1551, %v1552
  %v1554 = vrot.slane %v1553, 1
  %v1555 = vadd.f32 %v1553, %v1554
  %v1556 = vadd.f32 %v1398, %v1406
  %v1557 = vrot.slane %v1556, 4
  %v1558 = vadd.f32 %v1556, %v1557
  %v1559 = vrot.slane %v1558, 2
  %v1560 = vadd.f32 %v1558, %v1559
  %v1561 = vrot.slane %v1560, 1
  %v1562 = vadd.f32 %v1560, %v1561
  %v1563 = vadd.f32 %v1399, %v1407
  %v1564 = vrot.slane %v1563, 4
  %v1565 = vadd.f32 %v1563, %v1564
  %v1566 = vrot.slane %v1565, 2
  %v1567 = vadd.f32 %v1565, %v1566
  %v1568 = vrot.slane %v1567, 1
  %v1569 = vadd.f32 %v1567, %v1568
  %v1570 = vadd.f32 %v1400, %v1408
  %v1571 = vrot.slane %v1570, 4
  %v1572 = vadd.f32 %v1570, %v1571
  %v1573 = vrot.slane %v1572, 2
  %v1574 = vadd.f32 %v1572, %v1573
  %v1575 = vrot.slane %v1574, 1
  %v1576 = vadd.f32 %v1574, %v1575
  %v1577 = vadd.f32 %v1401, %v1409
  %v1578 = vrot.slane %v1577, 4
  %v1579 = vadd.f32 %v1577, %v1578
  %v1580 = vrot.slane %v1579, 2
  %v1581 = vadd.f32 %v1579, %v1580
  %v1582 = vrot.slane %v1581, 1
  %v1583 = vadd.f32 %v1581, %v1582
  %v1584 = vadd.f32 %v1402, %v1410
  %v1585 = vrot.slane %v1584, 4
  %v1586 = vadd.f32 %v1584, %v1585
  %v1587 = vrot.slane %v1586, 2
  %v1588 = vadd.f32 %v1586, %v1587
  %v1589 = vrot.slane %v1588, 1
  %v1590 = vadd.f32 %v1588, %v1589
  %v1591 = vadd.f32 %v1403, %v1411
  %v1592 = vrot.slane %v1591, 4
  %v1593 = vadd.f32 %v1591, %v1592
  %v1594 = vrot.slane %v1593, 2
  %v1595 = vadd.f32 %v1593, %v1594
  %v1596 = vrot.slane %v1595, 1
  %v1597 = vadd.f32 %v1595, %v1596
  %v1598 = vadd.f32 %v1404, %v1412
  %v1599 = vrot.slane %v1598, 4
  %v1600 = vadd.f32 %v1598, %v1599
  %v1601 = vrot.slane %v1600, 2
  %v1602 = vadd.f32 %v1600, %v1601
  %v1603 = vrot.slane %v1602, 1
  %v1604 = vadd.f32 %v1602, %v1603
  %v1605 = vadd.f32 %v1413, %v1421
  %v1606 = vrot.slane %v1605, 4
  %v1607 = vadd.f32 %v1605, %v1606
  %v1608 = vrot.slane %v1607, 2
  %v1609 = vadd.f32 %v1607, %v1608
  %v1610 = vrot.slane %v1609, 1
  %v1611 = vadd.f32 %v1609, %v1610
  %v1612 = vadd.f32 %v1414, %v1422
  %v1613 = vrot.slane %v1612, 4
  %v1614 = vadd.f32 %v1612, %v1613
  %v1615 = vrot.slane %v1614, 2
  %v1616 = vadd.f32 %v1614, %v1615
  %v1617 = vrot.slane %v1616, 1
  %v1618 = vadd.f32 %v1616, %v1617
  %v1619 = vadd.f32 %v1415, %v1423
  %v1620 = vrot.slane %v1619, 4
  %v1621 = vadd.f32 %v1619, %v1620
  %v1622 = vrot.slane %v1621, 2
  %v1623 = vadd.f32 %v1621, %v1622
  %v1624 = vrot.slane %v1623, 1
  %v1625 = vadd.f32 %v1623, %v1624
  %v1626 = vadd.f32 %v1416, %v1424
  %v1627 = vrot.slane %v1626, 4
  %v1628 = vadd.f32 %v1626, %v1627
  %v1629 = vrot.slane %v1628, 2
  %v1630 = vadd.f32 %v1628, %v1629
  %v1631 = vrot.slane %v1630, 1
  %v1632 = vadd.f32 %v1630, %v1631
  %v1633 = vadd.f32 %v1417, %v1425
  %v1634 = vrot.slane %v1633, 4
  %v1635 = vadd.f32 %v1633, %v1634
  %v1636 = vrot.slane %v1635, 2
  %v1637 = vadd.f32 %v1635, %v1636
  %v1638 = vrot.slane %v1637, 1
  %v1639 = vadd.f32 %v1637, %v1638
  %v1640 = vadd.f32 %v1418, %v1426
  %v1641 = vrot.slane %v1640, 4
  %v1642 = vadd.f32 %v1640, %v1641
  %v1643 = vrot.slane %v1642, 2
  %v1644 = vadd.f32 %v1642, %v1643
  %v1645 = vrot.slane %v1644, 1
  %v1646 = vadd.f32 %v1644, %v1645
  %v1647 = vadd.f32 %v1419, %v1427
  %v1648 = vrot.slane %v1647, 4
  %v1649 = vadd.f32 %v1647, %v1648
  %v1650 = vrot.slane %v1649, 2
  %v1651 = vadd.f32 %v1649, %v1650
  %v1652 = vrot.slane %v1651, 1
  %v1653 = vadd.f32 %v1651, %v1652
  %v1654 = vadd.f32 %v1420, %v1428
  %v1655 = vrot.slane %v1654, 4
  %v1656 = vadd.f32 %v1654, %v1655
  %v1657 = vrot.slane %v1656, 2
  %v1658 = vadd.f32 %v1656, %v1657
  %v1659 = vrot.slane %v1658, 1
  %v1660 = vadd.f32 %v1658, %v1659
  %v1661 = vadd.f32 %v1429, %v1437
  %v1662 = vrot.slane %v1661, 4
  %v1663 = vadd.f32 %v1661, %v1662
  %v1664 = vrot.slane %v1663, 2
  %v1665 = vadd.f32 %v1663, %v1664
  %v1666 = vrot.slane %v1665, 1
  %v1667 = vadd.f32 %v1665, %v1666
  %v1668 = vadd.f32 %v1430, %v1438
  %v1669 = vrot.slane %v1668, 4
  %v1670 = vadd.f32 %v1668, %v1669
  %v1671 = vrot.slane %v1670, 2
  %v1672 = vadd.f32 %v1670, %v1671
  %v1673 = vrot.slane %v1672, 1
  %v1674 = vadd.f32 %v1672, %v1673
  %v1675 = vadd.f32 %v1431, %v1439
  %v1676 = vrot.slane %v1675, 4
  %v1677 = vadd.f32 %v1675, %v1676
  %v1678 = vrot.slane %v1677, 2
  %v1679 = vadd.f32 %v1677, %v1678
  %v1680 = vrot.slane %v1679, 1
  %v1681 = vadd.f32 %v1679, %v1680
  %v1682 = vadd.f32 %v1432, %v1440
  %v1683 = vrot.slane %v1682, 4
  %v1684 = vadd.f32 %v1682, %v1683
  %v1685 = vrot.slane %v1684, 2
  %v1686 = vadd.f32 %v1684, %v1685
  %v1687 = vrot.slane %v1686, 1
  %v1688 = vadd.f32 %v1686, %v1687
  %v1689 = vadd.f32 %v1433, %v1441
  %v1690 = vrot.slane %v1689, 4
  %v1691 = vadd.f32 %v1689, %v1690
  %v1692 = vrot.slane %v1691, 2
  %v1693 = vadd.f32 %v1691, %v1692
  %v1694 = vrot.slane %v1693, 1
  %v1695 = vadd.f32 %v1693, %v1694
  %v1696 = vadd.f32 %v1434, %v1442
  %v1697 = vrot.slane %v1696, 4
  %v1698 = vadd.f32 %v1696, %v1697
  %v1699 = vrot.slane %v1698, 2
  %v1700 = vadd.f32 %v1698, %v1699
  %v1701 = vrot.slane %v1700, 1
  %v1702 = vadd.f32 %v1700, %v1701
  %v1703 = vadd.f32 %v1435, %v1443
  %v1704 = vrot.slane %v1703, 4
  %v1705 = vadd.f32 %v1703, %v1704
  %v1706 = vrot.slane %v1705, 2
  %v1707 = vadd.f32 %v1705, %v1706
  %v1708 = vrot.slane %v1707, 1
  %v1709 = vadd.f32 %v1707, %v1708
  %v1710 = vadd.f32 %v1436, %v1444
  %v1711 = vrot.slane %v1710, 4
  %v1712 = vadd.f32 %v1710, %v1711
  %v1713 = vrot.slane %v1712, 2
  %v1714 = vadd.f32 %v1712, %v1713
  %v1715 = vrot.slane %v1714, 1
  %v1716 = vadd.f32 %v1714, %v1715
  %v1717 = vadd.f32 %v1445, %v1453
  %v1718 = vrot.slane %v1717, 4
  %v1719 = vadd.f32 %v1717, %v1718
  %v1720 = vrot.slane %v1719, 2
  %v1721 = vadd.f32 %v1719, %v1720
  %v1722 = vrot.slane %v1721, 1
  %v1723 = vadd.f32 %v1721, %v1722
  %v1724 = vadd.f32 %v1446, %v1454
  %v1725 = vrot.slane %v1724, 4
  %v1726 = vadd.f32 %v1724, %v1725
  %v1727 = vrot.slane %v1726, 2
  %v1728 = vadd.f32 %v1726, %v1727
  %v1729 = vrot.slane %v1728, 1
  %v1730 = vadd.f32 %v1728, %v1729
  %v1731 = vadd.f32 %v1447, %v1455
  %v1732 = vrot.slane %v1731, 4
  %v1733 = vadd.f32 %v1731, %v1732
  %v1734 = vrot.slane %v1733, 2
  %v1735 = vadd.f32 %v1733, %v1734
  %v1736 = vrot.slane %v1735, 1
  %v1737 = vadd.f32 %v1735, %v1736
  %v1738 = vadd.f32 %v1448, %v1456
  %v1739 = vrot.slane %v1738, 4
  %v1740 = vadd.f32 %v1738, %v1739
  %v1741 = vrot.slane %v1740, 2
  %v1742 = vadd.f32 %v1740, %v1741
  %v1743 = vrot.slane %v1742, 1
  %v1744 = vadd.f32 %v1742, %v1743
  %v1745 = vadd.f32 %v1449, %v1457
  %v1746 = vrot.slane %v1745, 4
  %v1747 = vadd.f32 %v1745, %v1746
  %v1748 = vrot.slane %v1747, 2
  %v1749 = vadd.f32 %v1747, %v1748
  %v1750 = vrot.slane %v1749, 1
  %v1751 = vadd.f32 %v1749, %v1750
  %v1752 = vadd.f32 %v1450, %v1458
  %v1753 = vrot.slane %v1752, 4
  %v1754 = vadd.f32 %v1752, %v1753
  %v1755 = vrot.slane %v1754, 2
  %v1756 = vadd.f32 %v1754, %v1755
  %v1757 = vrot.slane %v1756, 1
  %v1758 = vadd.f32 %v1756, %v1757
  %v1759 = vadd.f32 %v1451, %v1459
  %v1760 = vrot.slane %v1759, 4
  %v1761 = vadd.f32 %v1759, %v1760
  %v1762 = vrot.slane %v1761, 2
  %v1763 = vadd.f32 %v1761, %v1762
  %v1764 = vrot.slane %v1763, 1
  %v1765 = vadd.f32 %v1763, %v1764
  %v1766 = vadd.f32 %v1452, %v1460
  %v1767 = vrot.slane %v1766, 4
  %v1768 = vadd.f32 %v1766, %v1767
  %v1769 = vrot.slane %v1768, 2
  %v1770 = vadd.f32 %v1768, %v1769
  %v1771 = vrot.slane %v1770, 1
  %v1772 = vadd.f32 %v1770, %v1771
  %v1773 = vadd.f32 %v1461, %v1469
  %v1774 = vrot.slane %v1773, 4
  %v1775 = vadd.f32 %v1773, %v1774
  %v1776 = vrot.slane %v1775, 2
  %v1777 = vadd.f32 %v1775, %v1776
  %v1778 = vrot.slane %v1777, 1
  %v1779 = vadd.f32 %v1777, %v1778
  %v1780 = vadd.f32 %v1462, %v1470
  %v1781 = vrot.slane %v1780, 4
  %v1782 = vadd.f32 %v1780, %v1781
  %v1783 = vrot.slane %v1782, 2
  %v1784 = vadd.f32 %v1782, %v1783
  %v1785 = vrot.slane %v1784, 1
  %v1786 = vadd.f32 %v1784, %v1785
  %v1787 = vadd.f32 %v1463, %v1471
  %v1788 = vrot.slane %v1787, 4
  %v1789 = vadd.f32 %v1787, %v1788
  %v1790 = vrot.slane %v1789, 2
  %v1791 = vadd.f32 %v1789, %v1790
  %v1792 = vrot.slane %v1791, 1
  %v1793 = vadd.f32 %v1791, %v1792
  %v1794 = vadd.f32 %v1464, %v1472
  %v1795 = vrot.slane %v1794, 4
  %v1796 = vadd.f32 %v1794, %v1795
  %v1797 = vrot.slane %v1796, 2
  %v1798 = vadd.f32 %v1796, %v1797
  %v1799 = vrot.slane %v1798, 1
  %v1800 = vadd.f32 %v1798, %v1799
  %v1801 = vadd.f32 %v1465, %v1473
  %v1802 = vrot.slane %v1801, 4
  %v1803 = vadd.f32 %v1801, %v1802
  %v1804 = vrot.slane %v1803, 2
  %v1805 = vadd.f32 %v1803, %v1804
  %v1806 = vrot.slane %v1805, 1
  %v1807 = vadd.f32 %v1805, %v1806
  %v1808 = vadd.f32 %v1466, %v1474
  %v1809 = vrot.slane %v1808, 4
  %v1810 = vadd.f32 %v1808, %v1809
  %v1811 = vrot.slane %v1810, 2
  %v1812 = vadd.f32 %v1810, %v1811
  %v1813 = vrot.slane %v1812, 1
  %v1814 = vadd.f32 %v1812, %v1813
  %v1815 = vadd.f32 %v1467, %v1475
  %v1816 = vrot.slane %v1815, 4
  %v1817 = vadd.f32 %v1815, %v1816
  %v1818 = vrot.slane %v1817, 2
  %v1819 = vadd.f32 %v1817, %v1818
  %v1820 = vrot.slane %v1819, 1
  %v1821 = vadd.f32 %v1819, %v1820
  %v1822 = vadd.f32 %v1468, %v1476
  %v1823 = vrot.slane %v1822, 4
  %v1824 = vadd.f32 %v1822, %v1823
  %v1825 = vrot.slane %v1824, 2
  %v1826 = vadd.f32 %v1824, %v1825
  %v1827 = vrot.slane %v1826, 1
  %v1828 = vadd.f32 %v1826, %v1827
  %v1829 = vadd.f32 %v1477, %v1485
  %v1830 = vrot.slane %v1829, 4
  %v1831 = vadd.f32 %v1829, %v1830
  %v1832 = vrot.slane %v1831, 2
  %v1833 = vadd.f32 %v1831, %v1832
  %v1834 = vrot.slane %v1833, 1
  %v1835 = vadd.f32 %v1833, %v1834
  %v1836 = vadd.f32 %v1478, %v1486
  %v1837 = vrot.slane %v1836, 4
  %v1838 = vadd.f32 %v1836, %v1837
  %v1839 = vrot.slane %v1838, 2
  %v1840 = vadd.f32 %v1838, %v1839
  %v1841 = vrot.slane %v1840, 1
  %v1842 = vadd.f32 %v1840, %v1841
  %v1843 = vadd.f32 %v1479, %v1487
  %v1844 = vrot.slane %v1843, 4
  %v1845 = vadd.f32 %v1843, %v1844
  %v1846 = vrot.slane %v1845, 2
  %v1847 = vadd.f32 %v1845, %v1846
  %v1848 = vrot.slane %v1847, 1
  %v1849 = vadd.f32 %v1847, %v1848
  %v1850 = vadd.f32 %v1480, %v1488
  %v1851 = vrot.slane %v1850, 4
  %v1852 = vadd.f32 %v1850, %v1851
  %v1853 = vrot.slane %v1852, 2
  %v1854 = vadd.f32 %v1852, %v1853
  %v1855 = vrot.slane %v1854, 1
  %v1856 = vadd.f32 %v1854, %v1855
  %v1857 = vadd.f32 %v1481, %v1489
  %v1858 = vrot.slane %v1857, 4
  %v1859 = vadd.f32 %v1857, %v1858
  %v1860 = vrot.slane %v1859, 2
  %v1861 = vadd.f32 %v1859, %v1860
  %v1862 = vrot.slane %v1861, 1
  %v1863 = vadd.f32 %v1861, %v1862
  %v1864 = vadd.f32 %v1482, %v1490
  %v1865 = vrot.slane %v1864, 4
  %v1866 = vadd.f32 %v1864, %v1865
  %v1867 = vrot.slane %v1866, 2
  %v1868 = vadd.f32 %v1866, %v1867
  %v1869 = vrot.slane %v1868, 1
  %v1870 = vadd.f32 %v1868, %v1869
  %v1871 = vadd.f32 %v1483, %v1491
  %v1872 = vrot.slane %v1871, 4
  %v1873 = vadd.f32 %v1871, %v1872
  %v1874 = vrot.slane %v1873, 2
  %v1875 = vadd.f32 %v1873, %v1874
  %v1876 = vrot.slane %v1875, 1
  %v1877 = vadd.f32 %v1875, %v1876
  %v1878 = vadd.f32 %v1484, %v1492
  %v1879 = vrot.slane %v1878, 4
  %v1880 = vadd.f32 %v1878, %v1879
  %v1881 = vrot.slane %v1880, 2
  %v1882 = vadd.f32 %v1880, %v1881
  %v1883 = vrot.slane %v1882, 1
  %v1884 = vadd.f32 %v1882, %v1883
  %v1997 = vrot.slane %v1051, 7
  %vm1998 = vcmask 1041409
  %v1999 = vsel %vm1998, %v1997, %v995
  %v2000 = vrot.slane %v1107, 6
  %vm2001 = vcmask 1042434
  %v2002 = vsel %vm2001, %v2000, %v1999
  %v2003 = vrot.slane %v1163, 5
  %vm2004 = vcmask 1043459
  %v2005 = vsel %vm2004, %v2003, %v2002
  %v2006 = vrot.slane %v1219, 4
  %vm2007 = vcmask 1044484
  %v2008 = vsel %vm2007, %v2006, %v2005
  %v2009 = vrot.slane %v1275, 3
  %vm2010 = vcmask 1045509
  %v2011 = vsel %vm2010, %v2009, %v2008
  %v2012 = vrot.slane %v1331, 2
  %vm2013 = vcmask 1046534
  %v2014 = vsel %vm2013, %v2012, %v2011
  %v2015 = vrot.slane %v1058, 7
  %v2016 = vsel %vm1998, %v2015, %v1002
  %v2017 = vrot.slane %v1114, 6
  %v2018 = vsel %vm2001, %v2017, %v2016
  %v2019 = vrot.slane %v1170, 5
  %v2020 = vsel %vm2004, %v2019, %v2018
  %v2021 = vrot.slane %v1226, 4
  %v2022 = vsel %vm2007, %v2021, %v2020
  %v2023 = vrot.slane %v1282, 3
  %v2024 = vsel %vm2010, %v2023, %v2022
  %v2025 = vrot.slane %v1338, 2
  %v2026 = vsel %vm2013, %v2025, %v2024
  %v2027 = vrot.slane %v1065, 7
  %v2028 = vsel %vm1998, %v2027, %v1009
  %v2029 = vrot.slane %v1121, 6
  %v2030 = vsel %vm2001, %v2029, %v2028
  %v2031 = vrot.slane %v1177, 5
  %v2032 = vsel %vm2004, %v2031, %v2030
  %v2033 = vrot.slane %v1233, 4
  %v2034 = vsel %vm2007, %v2033, %v2032
  %v2035 = vrot.slane %v1289, 3
  %v2036 = vsel %vm2010, %v2035, %v2034
  %v2037 = vrot.slane %v1345, 2
  %v2038 = vsel %vm2013, %v2037, %v2036
  %v2039 = vrot.slane %v1072, 7
  %v2040 = vsel %vm1998, %v2039, %v1016
  %v2041 = vrot.slane %v1128, 6
  %v2042 = vsel %vm2001, %v2041, %v2040
  %v2043 = vrot.slane %v1184, 5
  %v2044 = vsel %vm2004, %v2043, %v2042
  %v2045 = vrot.slane %v1240, 4
  %v2046 = vsel %vm2007, %v2045, %v2044
  %v2047 = vrot.slane %v1296, 3
  %v2048 = vsel %vm2010, %v2047, %v2046
  %v2049 = vrot.slane %v1352, 2
  %v2050 = vsel %vm2013, %v2049, %v2048
  %v2051 = vrot.slane %v1079, 7
  %v2052 = vsel %vm1998, %v2051, %v1023
  %v2053 = vrot.slane %v1135, 6
  %v2054 = vsel %vm2001, %v2053, %v2052
  %v2055 = vrot.slane %v1191, 5
  %v2056 = vsel %vm2004, %v2055, %v2054
  %v2057 = vrot.slane %v1247, 4
  %v2058 = vsel %vm2007, %v2057, %v2056
  %v2059 = vrot.slane %v1303, 3
  %v2060 = vsel %vm2010, %v2059, %v2058
  %v2061 = vrot.slane %v1359, 2
  %v2062 = vsel %vm2013, %v2061, %v2060
  %v2063 = vrot.slane %v1086, 7
  %v2064 = vsel %vm1998, %v2063, %v1030
  %v2065 = vrot.slane %v1142, 6
  %v2066 = vsel %vm2001, %v2065, %v2064
  %v2067 = vrot.slane %v1198, 5
  %v2068 = vsel %vm2004, %v2067, %v2066
  %v2069 = vrot.slane %v1254, 4
  %v2070 = vsel %vm2007, %v2069, %v2068
  %v2071 = vrot.slane %v1310, 3
  %v2072 = vsel %vm2010, %v2071, %v2070
  %v2073 = vrot.slane %v1366, 2
  %v2074 = vsel %vm2013, %v2073, %v2072
  %v2075 = vrot.slane %v1093, 7
  %v2076 = vsel %vm1998, %v2075, %v1037
  %v2077 = vrot.slane %v1149, 6
  %v2078 = vsel %vm2001, %v2077, %v2076
  %v2079 = vrot.slane %v1205, 5
  %v2080 = vsel %vm2004, %v2079, %v2078
  %v2081 = vrot.slane %v1261, 4
  %v2082 = vsel %vm2007, %v2081, %v2080
  %v2083 = vrot.slane %v1317, 3
  %v2084 = vsel %vm2010, %v2083, %v2082
  %v2085 = vrot.slane %v1373, 2
  %v2086 = vsel %vm2013, %v2085, %v2084
  %v2087 = vrot.slane %v1100, 7
  %v2088 = vsel %vm1998, %v2087, %v1044
  %v2089 = vrot.slane %v1156, 6
  %v2090 = vsel %vm2001, %v2089, %v2088
  %v2091 = vrot.slane %v1212, 5
  %v2092 = vsel %vm2004, %v2091, %v2090
  %v2093 = vrot.slane %v1268, 4
  %v2094 = vsel %vm2007, %v2093, %v2092
  %v2095 = vrot.slane %v1324, 3
  %v2096 = vsel %vm2010, %v2095, %v2094
  %v2097 = vrot.slane %v1380, 2
  %v2098 = vsel %vm2013, %v2097, %v2096
  %v2099 = vrot.slane %v1555, 7
  %v2100 = vsel %vm1998, %v2099, %v1499
  %v2101 = vrot.slane %v1611, 6
  %v2102 = vsel %vm2001, %v2101, %v2100
  %v2103 = vrot.slane %v1667, 5
  %v2104 = vsel %vm2004, %v2103, %v2102
  %v2105 = vrot.slane %v1723, 4
  %v2106 = vsel %vm2007, %v2105, %v2104
  %v2107 = vrot.slane %v1779, 3
  %v2108 = vsel %vm2010, %v2107, %v2106
  %v2109 = vrot.slane %v1835, 2
  %v2110 = vsel %vm2013, %v2109, %v2108
  %v2111 = vrot.slane %v1562, 7
  %v2112 = vsel %vm1998, %v2111, %v1506
  %v2113 = vrot.slane %v1618, 6
  %v2114 = vsel %vm2001, %v2113, %v2112
  %v2115 = vrot.slane %v1674, 5
  %v2116 = vsel %vm2004, %v2115, %v2114
  %v2117 = vrot.slane %v1730, 4
  %v2118 = vsel %vm2007, %v2117, %v2116
  %v2119 = vrot.slane %v1786, 3
  %v2120 = vsel %vm2010, %v2119, %v2118
  %v2121 = vrot.slane %v1842, 2
  %v2122 = vsel %vm2013, %v2121, %v2120
  %v2123 = vrot.slane %v1569, 7
  %v2124 = vsel %vm1998, %v2123, %v1513
  %v2125 = vrot.slane %v1625, 6
  %v2126 = vsel %vm2001, %v2125, %v2124
  %v2127 = vrot.slane %v1681, 5
  %v2128 = vsel %vm2004, %v2127, %v2126
  %v2129 = vrot.slane %v1737, 4
  %v2130 = vsel %vm2007, %v2129, %v2128
  %v2131 = vrot.slane %v1793, 3
  %v2132 = vsel %vm2010, %v2131, %v2130
  %v2133 = vrot.slane %v1849, 2
  %v2134 = vsel %vm2013, %v2133, %v2132
  %v2135 = vrot.slane %v1576, 7
  %v2136 = vsel %vm1998, %v2135, %v1520
  %v2137 = vrot.slane %v1632, 6
  %v2138 = vsel %vm2001, %v2137, %v2136
  %v2139 = vrot.slane %v1688, 5
  %v2140 = vsel %vm2004, %v2139, %v2138
  %v2141 = vrot.slane %v1744, 4
  %v2142 = vsel %vm2007, %v2141, %v2140
  %v2143 = vrot.slane %v1800, 3
  %v2144 = vsel %vm2010, %v2143, %v2142
  %v2145 = vrot.slane %v1856, 2
  %v2146 = vsel %vm2013, %v2145, %v2144
  %v2147 = vrot.slane %v1583, 7
  %v2148 = vsel %vm1998, %v2147, %v1527
  %v2149 = vrot.slane %v1639, 6
  %v2150 = vsel %vm2001, %v2149, %v2148
  %v2151 = vrot.slane %v1695, 5
  %v2152 = vsel %vm2004, %v2151, %v2150
  %v2153 = vrot.slane %v1751, 4
  %v2154 = vsel %vm2007, %v2153, %v2152
  %v2155 = vrot.slane %v1807, 3
  %v2156 = vsel %vm2010, %v2155, %v2154
  %v2157 = vrot.slane %v1863, 2
  %v2158 = vsel %vm2013, %v2157, %v2156
  %v2159 = vrot.slane %v1590, 7
  %v2160 = vsel %vm1998, %v2159, %v1534
  %v2161 = vrot.slane %v1646, 6
  %v2162 = vsel %vm2001, %v2161, %v2160
  %v2163 = vrot.slane %v1702, 5
  %v2164 = vsel %vm2004, %v2163, %v2162
  %v2165 = vrot.slane %v1758, 4
  %v2166 = vsel %vm2007, %v2165, %v2164
  %v2167 = vrot.slane %v1814, 3
  %v2168 = vsel %vm2010, %v2167, %v2166
  %v2169 = vrot.slane %v1870, 2
  %v2170 = vsel %vm2013, %v2169, %v2168
  %v2171 = vrot.slane %v1597, 7
  %v2172 = vsel %vm1998, %v2171, %v1541
  %v2173 = vrot.slane %v1653, 6
  %v2174 = vsel %vm2001, %v2173, %v2172
  %v2175 = vrot.slane %v1709, 5
  %v2176 = vsel %vm2004, %v2175, %v2174
  %v2177 = vrot.slane %v1765, 4
  %v2178 = vsel %vm2007, %v2177, %v2176
  %v2179 = vrot.slane %v1821, 3
  %v2180 = vsel %vm2010, %v2179, %v2178
  %v2181 = vrot.slane %v1877, 2
  %v2182 = vsel %vm2013, %v2181, %v2180
  %v2183 = vrot.slane %v1604, 7
  %v2184 = vsel %vm1998, %v2183, %v1548
  %v2185 = vrot.slane %v1660, 6
  %v2186 = vsel %vm2001, %v2185, %v2184
  %v2187 = vrot.slane %v1716, 5
  %v2188 = vsel %vm2004, %v2187, %v2186
  %v2189 = vrot.slane %v1772, 4
  %v2190 = vsel %vm2007, %v2189, %v2188
  %v2191 = vrot.slane %v1828, 3
  %v2192 = vsel %vm2010, %v2191, %v2190
  %v2193 = vrot.slane %v1884, 2
  %v2194 = vsel %vm2013, %v2193, %v2192
  %vm2211 = vcmask 1046528
  %v2212 = vsel %vm2211, %v2014, 0.0
  %v2213 = vsel %vm2211, %v2026, 0.0
  %v2214 = vadd.f32 %v2212, %v2213
  %v2215 = vsel %vm2211, %v2038, 0.0
  %v2216 = vadd.f32 %v2214, %v2215
  %v2217 = vsel %vm2211, %v2050, 0.0
  %v2218 = vadd.f32 %v2216, %v2217
  %v2219 = vsel %vm2211, %v2062, 0.0
  %v2220 = vadd.f32 %v2218, %v2219
  %v2221 = vsel %vm2211, %v2074, 0.0
  %v2222 = vadd.f32 %v2220, %v2221
  %v2223 = vsel %vm2211, %v2086, 0.0
  %v2224 = vadd.f32 %v2222, %v2223
  %v2225 = vsel %vm2211, %v2098, 0.0
  %v2226 = vadd.f32 %v2224, %v2225
  %2227 = vadd.xlane.f32.xlu0 %v2226
  %v2228 = vpop.xlane.xlu0 %2227
  %v2229 = vsel %vm2211, %v2110, 0.0
  %v2230 = vsel %vm2211, %v2122, 0.0
  %v2231 = vadd.f32 %v2229, %v2230
  %v2232 = vsel %vm2211, %v2134, 0.0
  %v2233 = vadd.f32 %v2231, %v2232
  %v2234 = vsel %vm2211, %v2146, 0.0
  %v2235 = vadd.f32 %v2233, %v2234
  %v2236 = vsel %vm2211, %v2158, 0.0
  %v2237 = vadd.f32 %v2235, %v2236
  %v2238 = vsel %vm2211, %v2170, 0.0
  %v2239 = vadd.f32 %v2237, %v2238
  %v2240 = vsel %vm2211, %v2182, 0.0
  %v2241 = vadd.f32 %v2239, %v2240
  %v2242 = vsel %vm2211, %v2194, 0.0
  %v2243 = vadd.f32 %v2241, %v2242
  %2244 = vadd.xlane.f32.xlu0 %v2243
  %v2245 = vpop.xlane.xlu0 %2244
  %v2246 = vld [vmem:[%s4] sm:$0x1]
  %v2248 = vlaneseq
  %v2249 = vshrl.u32 %v2248, 7
  %v2250 = vsub.s32 0, %v2249
  %v2251 = vrot.slane %v2246, %v2250
  %2253 = vbcast.lane.b32.xlu0 %v2251, 256
  %v2254 = vpop.permute.xlu0 %2253
  %v2256 = vadd.f32 %v2228, %v2254
  %v2257 = vadd.f32 %v2245, %v2254
  %2260 = vset.pattern.permute.xlu0 0
  %2261 = vperm.xlu0 %2260, %v2256
  %v2262 = vpop.permute.xlu0 %2261
  %2263 = vset.pattern.permute.xlu0 0
  %2264 = vperm.xlu0 %2263, %v2257
  %v2265 = vpop.permute.xlu0 %2264
  %v2266 = vlaneseq
  %v2267 = vand.u32 %v2266, 127
  %v2268 = vlaneseq
  %v2269 = vshrl.u32 %v2268, 7
  %v2270 = vsub.s32 %v2267, %v2269
  %v2271 = vrot.slane %v2262, %v2270
  %v2272 = vlaneseq
  %v2273 = vshrl.u32 %v2272, 7
  %v2274 = vsub.s32 %v2267, %v2273
  %v2275 = vrot.slane %v2265, %v2274
  %v2276 = vsel %vm1998, %v2275, %v2271
  %vm2278 = vcmask 50176
  %2279 = vst.msk [vmem:[%s5] sm:$0x3] %vm2278, %v2276
  // Predicated region
  $region22: #{ppo_forward_pallas.1} parent=0 // pred_check
    _
  $region23: #{ppo_forward_pallas.1} parent=0 // pred_check_branch
    %2281 = sbr.rel (0) target = $region25
  $region24: #{ppo_forward_pallas.1} parent=0 // pred_region
    _
  $region25: #{ppo_forward_pallas.1} parent=0 // pred_fallthru
    _
  // Predicated region
  $region26: #{ppo_forward_pallas.1} parent=0 // pred_check
    _
  $region27: #{ppo_forward_pallas.1} parent=0 // pred_check_branch
    %2283 = sbr.rel (0) target = $region29
  $region28: #{ppo_forward_pallas.1} parent=0 // pred_region
    _
  $region29: #{ppo_forward_pallas.1} parent=0 // pred_fallthru
    _

</llo_original>
